<compile_context>
chip_gen: v5e
topology: v5e:2x2
jax: 0.10.0
libtpu: 0.0.40
codegen_flags: <defaults>
</compile_context>

<pallas_src>
import jax
import jax.numpy as jnp
from jax.experimental import pallas as pl
from jax.experimental.pallas import tpu as pltpu

# ---- "args" equivalent (small, deterministic config) ----
VOCAB_SIZE = 50
VOCAB_PAD = 128        # vocab rows padded to one lane group for the one-hot gather
EMB_SIZE = 32          # args.emb_size
RNN_SIZE = 32          # args.rnn_size  (H)
RNN_LAYERS = 2         # args.rnn_layers (kernel specialized for 2)
RNN_TYPE = "LSTM"      # args.rnn_type
SEQ_LEN = 8            # T
BATCH = 2              # logical batch
BATCH_PAD = 8          # padded to one full sublane group
NUM_CLASSES = 3
LANE = 128             # TPU lane width

MM_DTYPE = jnp.bfloat16   # MXU input dtype (f32 accumulation everywhere)

assert RNN_LAYERS == 2, "kernel is specialized for 2 LSTM layers"
assert 4 * RNN_SIZE == LANE


def _lstm_decode_kernel(tok_ref, eproj_ref, wcomb_ref, dec_w_ref, dec_b_ref,
                        h_init_ref, c_init_ref, dec_out_ref, hid_out_ref):
    """Fused embedding-projection + 2-layer LSTM recurrence + time-mean + decoder."""
    H = RNN_SIZE
    Bp = BATCH_PAD
    T = SEQ_LEN

    # ---- embedding gather fused with the layer-0 input projection (one matmul) ----
    # one-hot (T*Bp, 128) @ eproj (128, 8H)  ==  embed[token] @ w_ih0 (interleaved cols)
    tok = tok_ref[...]                                             # (T*Bp, 1) int32
    vocab_iota = jax.lax.broadcasted_iota(jnp.int32, (T * Bp, VOCAB_PAD), 1)
    onehot = (vocab_iota == tok).astype(MM_DTYPE)
    xpw_flat = jnp.dot(onehot, eproj_ref[...],
                       preferred_element_type=jnp.float32)         # (T*Bp, 8H) f32

    def xp(t):  # aligned 8-row slice for timestep t (static t, Bp=8 -> sublane aligned)
        return xpw_flat[t * Bp:(t + 1) * Bp, :]

    wcomb = wcomb_ref[...]                                          # (2H, 8H) bf16

    # packed-state lane mask: lanes 0:H = layer 0, lanes H:2H = layer 1
    lane = jax.lax.broadcasted_iota(jnp.int32, (Bp, 2 * H), 1)
    l0_mask = lane < H

    def cell_pack(gates, c):
        # interleaved gate layout: [i0,i1 | f0,f1 | g0,g1 | o0,o1], each block H lanes.
        i = jax.nn.sigmoid(gates[:, 0:2 * H])
        f = jax.nn.sigmoid(gates[:, 2 * H:4 * H])
        g = jnp.tanh(gates[:, 4 * H:6 * H])
        o = jax.nn.sigmoid(gates[:, 6 * H:8 * H])
        c_new = f * c + i * g
        h_new = o * jnp.tanh(c_new)
        return h_new, c_new

    # packed recurrent state (f32): [h0 | h1], [c0 | c1]
    hz = jnp.concatenate([h_init_ref[0], h_init_ref[1]], axis=1)    # (Bp, 2H)
    cp = jnp.concatenate([c_init_ref[0], c_init_ref[1]], axis=1)

    # ---- prologue: layer-0 cell at t=0 (layer-1 lanes masked back to init state) ----
    comb = jnp.dot(hz.astype(MM_DTYPE), wcomb, preferred_element_type=jnp.float32)
    h_try, c_try = cell_pack(xp(0) + comb, cp)
    hz = jnp.where(l0_mask, h_try, hz)          # hz = [h0_0 | h1_init]
    cp = jnp.where(l0_mask, c_try, cp)          # cp = [c0_0 | c1_init]

    acc = jnp.zeros((Bp, 2 * H), jnp.float32)

    # ---- fused recurrence: ONE matmul per step gives layer-1 gates of step k and
    #      the layer-0 recurrent gates of step k+1 (fully unrolled, T static) ----
    for k in range(T - 1):
        comb = jnp.dot(hz.astype(MM_DTYPE), wcomb, preferred_element_type=jnp.float32)
        hz, cp = cell_pack(xp(k + 1) + comb, cp)    # hz = [h0_{k+1} | h1_k]
        acc = acc + hz                              # layer-1 lanes accumulate h1_k

    # ---- epilogue: layer-1 cell at t=T-1 (layer-0 lanes must not advance past T-1) --
    comb = jnp.dot(hz.astype(MM_DTYPE), wcomb, preferred_element_type=jnp.float32)
    h_try, c_try = cell_pack(comb, cp)              # layer-1 lanes: step T-1
    acc = acc + h_try
    h_fin = jnp.where(l0_mask, hz, h_try)           # [h0_{T-1} | h1_{T-1}]
    c_fin = jnp.where(l0_mask, cp, c_try)           # [c0_{T-1} | c1_{T-1}]

    # ---- torch.mean(output, 0) + decoder Linear(H, 3) (lane-padded to 128) ----
    mean = acc[:, H:2 * H] * (1.0 / T)
    dec_out_ref[...] = (jnp.dot(mean.astype(MM_DTYPE), dec_w_ref[...],
                                preferred_element_type=jnp.float32)
                        + dec_b_ref[...])
    # final hidden state packed lane-dense: [h0 | h1 | c0 | c1] -> (Bp, 128)
    hid_out_ref[...] = jnp.concatenate([h_fin, c_fin], axis=1)


def init_params(key):
    initrange = 0.1
    k = jax.random.split(key, 4 + 2 * RNN_LAYERS)
    params = {}
    # nn.Embedding(vocab, emb) with uniform(-0.1, 0.1)
    params["embed"] = jax.random.uniform(
        k[0], (VOCAB_SIZE, EMB_SIZE), jnp.float32, -initrange, initrange)
    # LSTM weights (bias=False), PyTorch default init U(-1/sqrt(H), 1/sqrt(H)),
    # stored pre-transposed: w_ih_l : (in, 4H), w_hh_l : (H, 4H), gate order i,f,g,o
    stdv = 1.0 / (RNN_SIZE ** 0.5)
    w_ih, w_hh = [], []
    for l in range(RNN_LAYERS):
        in_dim = EMB_SIZE if l == 0 else RNN_SIZE
        w_ih.append(jax.random.uniform(
            k[1 + 2 * l], (in_dim, 4 * RNN_SIZE), jnp.float32, -stdv, stdv))
        w_hh.append(jax.random.uniform(
            k[2 + 2 * l], (RNN_SIZE, 4 * RNN_SIZE), jnp.float32, -stdv, stdv))
    params["w_ih"] = w_ih
    params["w_hh"] = w_hh
    # decoder Linear(H, 3): weight U(-0.1, 0.1), bias zeros
    params["dec_w"] = jax.random.uniform(
        k[-1], (RNN_SIZE, NUM_CLASSES), jnp.float32, -initrange, initrange)
    params["dec_b"] = jnp.zeros((1, NUM_CLASSES), jnp.float32)
    return params


def pack_params(params):
    """One-time packing/padding/bf16 cast of all kernel weights (done at init)."""
    H = RNN_SIZE

    def interleave(a, b):
        # (rows,4H),(rows,4H) -> (rows,8H) with column blocks [i0,i1,f0,f1,g0,g1,o0,o1]
        cols = []
        for g in range(4):
            cols.append(a[:, g * H:(g + 1) * H])
            cols.append(b[:, g * H:(g + 1) * H])
        return jnp.concatenate(cols, axis=1)

    w_ih0, w_hh0 = params["w_ih"][0], params["w_hh"][0]
    w_ih1, w_hh1 = params["w_ih"][1], params["w_hh"][1]

    # fused recurrence weight: rows 0:H multiply h0, rows H:2H multiply h1
    w_comb = jnp.concatenate(
        [interleave(w_hh0, w_ih1),
         interleave(jnp.zeros_like(w_hh1), w_hh1)], axis=0)         # (2H, 8H)

    # embedding gather fused with layer-0 input projection (vocab rows padded to 128)
    w_ih0_wide = interleave(w_ih0, jnp.zeros_like(w_ih0))            # (E, 8H)
    embed_pad = jnp.zeros((VOCAB_PAD, EMB_SIZE), jnp.float32).at[
        :VOCAB_SIZE].set(params["embed"])
    embed_proj = embed_pad @ w_ih0_wide                              # (128, 8H) f32

    dec_w_pad = jnp.zeros((H, LANE), jnp.float32).at[:, :NUM_CLASSES].set(
        params["dec_w"])
    dec_b_pad = jnp.zeros((1, LANE), jnp.float32).at[:, :NUM_CLASSES].set(
        params["dec_b"])

    return {
        "embed_proj": embed_proj.astype(MM_DTYPE),
        "w_comb": w_comb.astype(MM_DTYPE),
        "dec_w_pad": dec_w_pad.astype(MM_DTYPE),
        "dec_b_pad": dec_b_pad,                    # bias stays f32
    }


@jax.jit
def basic_rnn_forward(packed, tokens, hidden):
    """tokens: (T, B) int32.  hidden: (h0, c0), each (L, B, H) f32."""
    h0, c0 = hidden
    T, B = tokens.shape
    H = RNN_SIZE
    Bp = BATCH_PAD

    # batch-pad to one sublane group; tokens flattened row-major (t, b) as a column
    tok_pad = jnp.zeros((T, Bp), jnp.int32).at[:, :B].set(tokens).reshape(T * Bp, 1)
    h_pad = jnp.zeros((RNN_LAYERS, Bp, H), jnp.float32).at[:, :B].set(h0)
    c_pad = jnp.zeros((RNN_LAYERS, Bp, H), jnp.float32).at[:, :B].set(c0)

    vmem = pl.BlockSpec(memory_space=pltpu.MemorySpace.VMEM)
    dec_pad, hid_pack = pl.pallas_call(
        _lstm_decode_kernel,
        out_shape=(
            jax.ShapeDtypeStruct((Bp, LANE), jnp.float32),   # decoder (lane-padded)
            jax.ShapeDtypeStruct((Bp, LANE), jnp.float32),   # [h0|h1|c0|c1] packed
        ),
        in_specs=[vmem] * 7,
        out_specs=(vmem, vmem),
    )(tok_pad, packed["embed_proj"], packed["w_comb"],
      packed["dec_w_pad"], packed["dec_b_pad"], h_pad, c_pad)

    decoded = dec_pad[:B, :NUM_CLASSES]
    h_n = jnp.stack([hid_pack[:B, 0:H], hid_pack[:B, H:2 * H]], axis=0)
    c_n = jnp.stack([hid_pack[:B, 2 * H:3 * H], hid_pack[:B, 3 * H:4 * H]], axis=0)
    return decoded, (h_n, c_n)


def basic_rnn_forward_matched_ref(packed, tokens, hidden):
    """Plain-JAX emulation of the kernel's exact arithmetic (same packed bf16 weights,
    same cast points) -> tight numerical check of the Pallas lowering."""
    H = RNN_SIZE
    T, B = tokens.shape
    h0, c0 = hidden
    xpw = packed["embed_proj"][tokens].astype(jnp.float32)          # (T, B, 8H)
    wcomb = packed["w_comb"]
    l0 = (jnp.arange(2 * H)[None, :] < H)

    def cell_pack(g, c):
        i = jax.nn.sigmoid(g[:, 0:2 * H]); f = jax.nn.sigmoid(g[:, 2 * H:4 * H])
        gg = jnp.tanh(g[:, 4 * H:6 * H]); o = jax.nn.sigmoid(g[:, 6 * H:8 * H])
        c_new = f * c + i * gg
        return o * jnp.tanh(c_new), c_new

    hz = jnp.concatenate([h0[0], h0[1]], axis=1)
    cp = jnp.concatenate([c0[0], c0[1]], axis=1)

    comb = jnp.dot(hz.astype(MM_DTYPE), wcomb, preferred_element_type=jnp.float32)
    h_try, c_try = cell_pack(xpw[0] + comb, cp)
    hz = jnp.where(l0, h_try, hz); cp = jnp.where(l0, c_try, cp)

    acc = jnp.zeros_like(hz)
    for k in range(T - 1):
        comb = jnp.dot(hz.astype(MM_DTYPE), wcomb, preferred_element_type=jnp.float32)
        hz, cp = cell_pack(xpw[k + 1] + comb, cp)
        acc = acc + hz

    comb = jnp.dot(hz.astype(MM_DTYPE), wcomb, preferred_element_type=jnp.float32)
    h_try, c_try = cell_pack(comb, cp)
    acc = acc + h_try
    h_fin = jnp.where(l0, hz, h_try); c_fin = jnp.where(l0, cp, c_try)

    mean = acc[:, H:2 * H] / T
    dec = (jnp.dot(mean.astype(MM_DTYPE), packed["dec_w_pad"],
                   preferred_element_type=jnp.float32)
           + packed["dec_b_pad"])[:, :NUM_CLASSES]
    h_n = jnp.stack([h_fin[:, :H], h_fin[:, H:]], axis=0)
    c_n = jnp.stack([c_fin[:, :H], c_fin[:, H:]], axis=0)
    return dec, (h_n, c_n)


def basic_rnn_forward_f32_ref(params, tokens, hidden):
    """Pure-f32 PyTorch-semantics reference (standard 2-layer LSTM, bias=False)."""
    H = RNN_SIZE
    T, B = tokens.shape
    h0, c0 = hidden
    h = [h0[0], h0[1]]
    c = [c0[0], c0[1]]
    w_ih0, w_hh0 = params["w_ih"][0], params["w_hh"][0]
    w1 = jnp.concatenate([params["w_ih"][1], params["w_hh"][1]], axis=0)
    emb = params["embed"][tokens]                                   # (T, B, E)

    def cell(g, c_prev):
        i = jax.nn.sigmoid(g[:, :H]); f = jax.nn.sigmoid(g[:, H:2 * H])
        gg = jnp.tanh(g[:, 2 * H:3 * H]); o = jax.nn.sigmoid(g[:, 3 * H:4 * H])
        c_new = f * c_prev + i * gg
        return o * jnp.tanh(c_new), c_new

    outs = []
    for t in range(T):
        g0 = emb[t] @ w_ih0 + h[0] @ w_hh0
        h[0], c[0] = cell(g0, c[0])
        g1 = jnp.concatenate([h[0], h[1]], axis=1) @ w1
        h[1], c[1] = cell(g1, c[1])
        outs.append(h[1])

    mean = jnp.mean(jnp.stack(outs, 0), axis=0)
    dec = mean @ params["dec_w"] + params["dec_b"]
    return dec, (jnp.stack(h, 0), jnp.stack(c, 0))


if __name__ == "__main__":
    key = jax.random.PRNGKey(0)
    pkey, tkey = jax.random.split(key)
    params = init_params(pkey)
    packed = pack_params(params)          # one-time weight packing (review item 4)

    tokens = jax.random.randint(tkey, (SEQ_LEN, BATCH), 0, VOCAB_SIZE, jnp.int32)
    # init_hidden(bsz) for LSTM: zeros (L, B, H) for both h and c
    h0 = jnp.zeros((RNN_LAYERS, BATCH, RNN_SIZE), jnp.float32)
    c0 = jnp.zeros((RNN_LAYERS, BATCH, RNN_SIZE), jnp.float32)

    # TODO(synk): 'ATT' attention branch of model_type is not exercised (model_type has no 'ATT').
    dec, (h_n, c_n) = basic_rnn_forward(packed, tokens, (h0, c0))
    jax.block_until_ready((dec, h_n, c_n))

    # tight check vs. a reference mirroring the kernel's exact bf16/f32 arithmetic
    dec_m, (h_m, c_m) = basic_rnn_forward_matched_ref(packed, tokens, (h0, c0))
    assert jnp.allclose(dec, dec_m, atol=1e-3), "decoded mismatch (matched ref)"
    assert jnp.allclose(h_n, h_m, atol=1e-3), "hidden h mismatch (matched ref)"
    assert jnp.allclose(c_n, c_m, atol=1e-3), "hidden c mismatch (matched ref)"

    # loose sanity check vs. the pure-f32 (PyTorch-semantics) reference
    dec_f, (h_f, c_f) = basic_rnn_forward_f32_ref(params, tokens, (h0, c0))
    assert jnp.allclose(dec, dec_f, atol=3e-2), "decoded drift vs f32 reference"
    assert jnp.allclose(h_n, h_f, atol=3e-2), "hidden h drift vs f32 reference"
    assert jnp.allclose(c_n, c_f, atol=3e-2), "hidden c drift vs f32 reference"

    print("KERNEL_OK")
</pallas_src>

<mosaic_0001>
module attributes {stable_mosaic.version = 11 : i64} {
  func.func @_lstm_decode_kernel(%arg0: memref<64x1xi32, #tpu.memory_space<vmem>>, %arg1: memref<128x256xbf16, #tpu.memory_space<vmem>>, %arg2: memref<64x256xbf16, #tpu.memory_space<vmem>>, %arg3: memref<32x128xbf16, #tpu.memory_space<vmem>>, %arg4: memref<1x128xf32, #tpu.memory_space<vmem>>, %arg5: memref<2x8x32xf32, #tpu.memory_space<vmem>>, %arg6: memref<2x8x32xf32, #tpu.memory_space<vmem>>, %arg7: memref<8x128xf32, #tpu.memory_space<vmem>>, %arg8: memref<8x128xf32, #tpu.memory_space<vmem>>) attributes {dimension_semantics = [], scalar_prefetch = 0 : i64, scratch_operands = 0 : i64, tpu.core_type = #tpu.core_type<tc>} {
    %c0 = arith.constant 0 : index
    %c0_0 = arith.constant 0 : index
    %0 = vector.load %arg0[%c0, %c0_0] : memref<64x1xi32, #tpu.memory_space<vmem>>, vector<64x1xi32>
    %1 = tpu.iota {dimensions = array<i32: 1>} : vector<64x128xi32>
    %2 = vector.broadcast %0 : vector<64x1xi32> to vector<64x128xi32>
    %3 = arith.cmpi eq, %1, %2 : vector<64x128xi32>
    %4 = arith.extui %3 : vector<64x128xi1> to vector<64x128xi32>
    %5 = arith.sitofp %4 : vector<64x128xi32> to vector<64x128xf32>
    %6 = arith.truncf %5 : vector<64x128xf32> to vector<64x128xbf16>
    %c0_1 = arith.constant 0 : index
    %c0_2 = arith.constant 0 : index
    %7 = vector.load %arg1[%c0_1, %c0_2] : memref<128x256xbf16, #tpu.memory_space<vmem>>, vector<128x256xbf16>
    %cst = arith.constant dense<0.000000e+00> : vector<64x256xf32>
    %8 = tpu.matmul %6, %7, %cst {dimension_numbers = #tpu.dot_dimension_numbers<[1], [0], [0], [1], [0, 0, 1, 1], [], []>} : vector<64x128xbf16>, vector<128x256xbf16>, vector<64x256xf32> -> vector<64x256xf32>
    %c0_3 = arith.constant 0 : index
    %c0_4 = arith.constant 0 : index
    %9 = vector.load %arg2[%c0_3, %c0_4] : memref<64x256xbf16, #tpu.memory_space<vmem>>, vector<64x256xbf16>
    %10 = tpu.iota {dimensions = array<i32: 1>} : vector<8x64xi32>
    %c32_i32 = arith.constant 32 : i32
    %11 = vector.broadcast %c32_i32 : i32 to vector<8x64xi32>
    %12 = arith.cmpi slt, %10, %11 : vector<8x64xi32>
    %c0_5 = arith.constant 0 : index
    %c0_6 = arith.constant 0 : index
    %c0_7 = arith.constant 0 : index
    %13 = vector.load %arg5[%c0_5, %c0_6, %c0_7] : memref<2x8x32xf32, #tpu.memory_space<vmem>>, vector<1x8x32xf32>
    %14 = vector.shape_cast %13 : vector<1x8x32xf32> to vector<8x32xf32>
    %c1 = arith.constant 1 : index
    %c0_8 = arith.constant 0 : index
    %c0_9 = arith.constant 0 : index
    %15 = vector.load %arg5[%c1, %c0_8, %c0_9] : memref<2x8x32xf32, #tpu.memory_space<vmem>>, vector<1x8x32xf32>
    %16 = vector.shape_cast %15 : vector<1x8x32xf32> to vector<8x32xf32>
    %17 = tpu.concatenate %14, %16 in 1 : vector<8x32xf32>, vector<8x32xf32> -> vector<8x64xf32>
    %c0_10 = arith.constant 0 : index
    %c0_11 = arith.constant 0 : index
    %c0_12 = arith.constant 0 : index
    %18 = vector.load %arg6[%c0_10, %c0_11, %c0_12] : memref<2x8x32xf32, #tpu.memory_space<vmem>>, vector<1x8x32xf32>
    %19 = vector.shape_cast %18 : vector<1x8x32xf32> to vector<8x32xf32>
    %c1_13 = arith.constant 1 : index
    %c0_14 = arith.constant 0 : index
    %c0_15 = arith.constant 0 : index
    %20 = vector.load %arg6[%c1_13, %c0_14, %c0_15] : memref<2x8x32xf32, #tpu.memory_space<vmem>>, vector<1x8x32xf32>
    %21 = vector.shape_cast %20 : vector<1x8x32xf32> to vector<8x32xf32>
    %22 = tpu.concatenate %19, %21 in 1 : vector<8x32xf32>, vector<8x32xf32> -> vector<8x64xf32>
    %23 = arith.truncf %17 : vector<8x64xf32> to vector<8x64xbf16>
    %cst_16 = arith.constant dense<0.000000e+00> : vector<8x256xf32>
    %24 = tpu.matmul %23, %9, %cst_16 {dimension_numbers = #tpu.dot_dimension_numbers<[1], [0], [0], [1], [0, 0, 1, 1], [], []>} : vector<8x64xbf16>, vector<64x256xbf16>, vector<8x256xf32> -> vector<8x256xf32>
    %25 = vector.extract_strided_slice %8 {offsets = [0, 0], sizes = [8, 256], strides = [1, 1]} : vector<64x256xf32> to vector<8x256xf32>
    %26 = arith.addf %25, %24 : vector<8x256xf32>
    %27 = vector.extract_strided_slice %26 {offsets = [0, 0], sizes = [8, 64], strides = [1, 1]} : vector<8x256xf32> to vector<8x64xf32>
    %28 = arith.negf %27 : vector<8x64xf32>
    %29 = math.exp %28 : vector<8x64xf32>
    %cst_17 = arith.constant 1.000000e+00 : f32
    %30 = vector.broadcast %cst_17 : f32 to vector<8x64xf32>
    %31 = arith.addf %30, %29 : vector<8x64xf32>
    %32 = arith.divf %30, %31 : vector<8x64xf32>
    %33 = vector.extract_strided_slice %26 {offsets = [0, 64], sizes = [8, 64], strides = [1, 1]} : vector<8x256xf32> to vector<8x64xf32>
    %34 = arith.negf %33 : vector<8x64xf32>
    %35 = math.exp %34 : vector<8x64xf32>
    %cst_18 = arith.constant 1.000000e+00 : f32
    %36 = vector.broadcast %cst_18 : f32 to vector<8x64xf32>
    %37 = arith.addf %36, %35 : vector<8x64xf32>
    %38 = arith.divf %36, %37 : vector<8x64xf32>
    %39 = vector.extract_strided_slice %26 {offsets = [0, 128], sizes = [8, 64], strides = [1, 1]} : vector<8x256xf32> to vector<8x64xf32>
    %40 = math.tanh %39 : vector<8x64xf32>
    %41 = vector.extract_strided_slice %26 {offsets = [0, 192], sizes = [8, 64], strides = [1, 1]} : vector<8x256xf32> to vector<8x64xf32>
    %42 = arith.negf %41 : vector<8x64xf32>
    %43 = math.exp %42 : vector<8x64xf32>
    %cst_19 = arith.constant 1.000000e+00 : f32
    %44 = vector.broadcast %cst_19 : f32 to vector<8x64xf32>
    %45 = arith.addf %44, %43 : vector<8x64xf32>
    %46 = arith.divf %44, %45 : vector<8x64xf32>
    %47 = arith.mulf %38, %22 : vector<8x64xf32>
    %48 = arith.mulf %32, %40 : vector<8x64xf32>
    %49 = arith.addf %47, %48 : vector<8x64xf32>
    %50 = math.tanh %49 : vector<8x64xf32>
    %51 = arith.mulf %46, %50 : vector<8x64xf32>
    %52 = arith.select %12, %51, %17 : vector<8x64xi1>, vector<8x64xf32>
    %53 = arith.select %12, %49, %22 : vector<8x64xi1>, vector<8x64xf32>
    %cst_20 = arith.constant 0.000000e+00 : f32
    %54 = vector.broadcast %cst_20 : f32 to vector<8x64xf32>
    %55 = arith.truncf %52 : vector<8x64xf32> to vector<8x64xbf16>
    %cst_21 = arith.constant dense<0.000000e+00> : vector<8x256xf32>
    %56 = tpu.matmul %55, %9, %cst_21 {dimension_numbers = #tpu.dot_dimension_numbers<[1], [0], [0], [1], [0, 0, 1, 1], [], []>} : vector<8x64xbf16>, vector<64x256xbf16>, vector<8x256xf32> -> vector<8x256xf32>
    %57 = vector.extract_strided_slice %8 {offsets = [8, 0], sizes = [8, 256], strides = [1, 1]} : vector<64x256xf32> to vector<8x256xf32>
    %58 = arith.addf %57, %56 : vector<8x256xf32>
    %59 = vector.extract_strided_slice %58 {offsets = [0, 0], sizes = [8, 64], strides = [1, 1]} : vector<8x256xf32> to vector<8x64xf32>
    %60 = arith.negf %59 : vector<8x64xf32>
    %61 = math.exp %60 : vector<8x64xf32>
    %cst_22 = arith.constant 1.000000e+00 : f32
    %62 = vector.broadcast %cst_22 : f32 to vector<8x64xf32>
    %63 = arith.addf %62, %61 : vector<8x64xf32>
    %64 = arith.divf %62, %63 : vector<8x64xf32>
    %65 = vector.extract_strided_slice %58 {offsets = [0, 64], sizes = [8, 64], strides = [1, 1]} : vector<8x256xf32> to vector<8x64xf32>
    %66 = arith.negf %65 : vector<8x64xf32>
    %67 = math.exp %66 : vector<8x64xf32>
    %cst_23 = arith.constant 1.000000e+00 : f32
    %68 = vector.broadcast %cst_23 : f32 to vector<8x64xf32>
    %69 = arith.addf %68, %67 : vector<8x64xf32>
    %70 = arith.divf %68, %69 : vector<8x64xf32>
    %71 = vector.extract_strided_slice %58 {offsets = [0, 128], sizes = [8, 64], strides = [1, 1]} : vector<8x256xf32> to vector<8x64xf32>
    %72 = math.tanh %71 : vector<8x64xf32>
    %73 = vector.extract_strided_slice %58 {offsets = [0, 192], sizes = [8, 64], strides = [1, 1]} : vector<8x256xf32> to vector<8x64xf32>
    %74 = arith.negf %73 : vector<8x64xf32>
    %75 = math.exp %74 : vector<8x64xf32>
    %cst_24 = arith.constant 1.000000e+00 : f32
    %76 = vector.broadcast %cst_24 : f32 to vector<8x64xf32>
    %77 = arith.addf %76, %75 : vector<8x64xf32>
    %78 = arith.divf %76, %77 : vector<8x64xf32>
    %79 = arith.mulf %70, %53 : vector<8x64xf32>
    %80 = arith.mulf %64, %72 : vector<8x64xf32>
    %81 = arith.addf %79, %80 : vector<8x64xf32>
    %82 = math.tanh %81 : vector<8x64xf32>
    %83 = arith.mulf %78, %82 : vector<8x64xf32>
    %84 = arith.addf %54, %83 : vector<8x64xf32>
    %85 = arith.truncf %83 : vector<8x64xf32> to vector<8x64xbf16>
    %cst_25 = arith.constant dense<0.000000e+00> : vector<8x256xf32>
    %86 = tpu.matmul %85, %9, %cst_25 {dimension_numbers = #tpu.dot_dimension_numbers<[1], [0], [0], [1], [0, 0, 1, 1], [], []>} : vector<8x64xbf16>, vector<64x256xbf16>, vector<8x256xf32> -> vector<8x256xf32>
    %87 = vector.extract_strided_slice %8 {offsets = [16, 0], sizes = [8, 256], strides = [1, 1]} : vector<64x256xf32> to vector<8x256xf32>
    %88 = arith.addf %87, %86 : vector<8x256xf32>
    %89 = vector.extract_strided_slice %88 {offsets = [0, 0], sizes = [8, 64], strides = [1, 1]} : vector<8x256xf32> to vector<8x64xf32>
    %90 = arith.negf %89 : vector<8x64xf32>
    %91 = math.exp %90 : vector<8x64xf32>
    %cst_26 = arith.constant 1.000000e+00 : f32
    %92 = vector.broadcast %cst_26 : f32 to vector<8x64xf32>
    %93 = arith.addf %92, %91 : vector<8x64xf32>
    %94 = arith.divf %92, %93 : vector<8x64xf32>
    %95 = vector.extract_strided_slice %88 {offsets = [0, 64], sizes = [8, 64], strides = [1, 1]} : vector<8x256xf32> to vector<8x64xf32>
    %96 = arith.negf %95 : vector<8x64xf32>
    %97 = math.exp %96 : vector<8x64xf32>
    %cst_27 = arith.constant 1.000000e+00 : f32
    %98 = vector.broadcast %cst_27 : f32 to vector<8x64xf32>
    %99 = arith.addf %98, %97 : vector<8x64xf32>
    %100 = arith.divf %98, %99 : vector<8x64xf32>
    %101 = vector.extract_strided_slice %88 {offsets = [0, 128], sizes = [8, 64], strides = [1, 1]} : vector<8x256xf32> to vector<8x64xf32>
    %102 = math.tanh %101 : vector<8x64xf32>
    %103 = vector.extract_strided_slice %88 {offsets = [0, 192], sizes = [8, 64], strides = [1, 1]} : vector<8x256xf32> to vector<8x64xf32>
    %104 = arith.negf %103 : vector<8x64xf32>
    %105 = math.exp %104 : vector<8x64xf32>
    %cst_28 = arith.constant 1.000000e+00 : f32
    %106 = vector.broadcast %cst_28 : f32 to vector<8x64xf32>
    %107 = arith.addf %106, %105 : vector<8x64xf32>
    %108 = arith.divf %106, %107 : vector<8x64xf32>
    %109 = arith.mulf %100, %81 : vector<8x64xf32>
    %110 = arith.mulf %94, %102 : vector<8x64xf32>
    %111 = arith.addf %109, %110 : vector<8x64xf32>
    %112 = math.tanh %111 : vector<8x64xf32>
    %113 = arith.mulf %108, %112 : vector<8x64xf32>
    %114 = arith.addf %84, %113 : vector<8x64xf32>
    %115 = arith.truncf %113 : vector<8x64xf32> to vector<8x64xbf16>
    %cst_29 = arith.constant dense<0.000000e+00> : vector<8x256xf32>
    %116 = tpu.matmul %115, %9, %cst_29 {dimension_numbers = #tpu.dot_dimension_numbers<[1], [0], [0], [1], [0, 0, 1, 1], [], []>} : vector<8x64xbf16>, vector<64x256xbf16>, vector<8x256xf32> -> vector<8x256xf32>
    %117 = vector.extract_strided_slice %8 {offsets = [24, 0], sizes = [8, 256], strides = [1, 1]} : vector<64x256xf32> to vector<8x256xf32>
    %118 = arith.addf %117, %116 : vector<8x256xf32>
    %119 = vector.extract_strided_slice %118 {offsets = [0, 0], sizes = [8, 64], strides = [1, 1]} : vector<8x256xf32> to vector<8x64xf32>
    %120 = arith.negf %119 : vector<8x64xf32>
    %121 = math.exp %120 : vector<8x64xf32>
    %cst_30 = arith.constant 1.000000e+00 : f32
    %122 = vector.broadcast %cst_30 : f32 to vector<8x64xf32>
    %123 = arith.addf %122, %121 : vector<8x64xf32>
    %124 = arith.divf %122, %123 : vector<8x64xf32>
    %125 = vector.extract_strided_slice %118 {offsets = [0, 64], sizes = [8, 64], strides = [1, 1]} : vector<8x256xf32> to vector<8x64xf32>
    %126 = arith.negf %125 : vector<8x64xf32>
    %127 = math.exp %126 : vector<8x64xf32>
    %cst_31 = arith.constant 1.000000e+00 : f32
    %128 = vector.broadcast %cst_31 : f32 to vector<8x64xf32>
    %129 = arith.addf %128, %127 : vector<8x64xf32>
    %130 = arith.divf %128, %129 : vector<8x64xf32>
    %131 = vector.extract_strided_slice %118 {offsets = [0, 128], sizes = [8, 64], strides = [1, 1]} : vector<8x256xf32> to vector<8x64xf32>
    %132 = math.tanh %131 : vector<8x64xf32>
    %133 = vector.extract_strided_slice %118 {offsets = [0, 192], sizes = [8, 64], strides = [1, 1]} : vector<8x256xf32> to vector<8x64xf32>
    %134 = arith.negf %133 : vector<8x64xf32>
    %135 = math.exp %134 : vector<8x64xf32>
    %cst_32 = arith.constant 1.000000e+00 : f32
    %136 = vector.broadcast %cst_32 : f32 to vector<8x64xf32>
    %137 = arith.addf %136, %135 : vector<8x64xf32>
    %138 = arith.divf %136, %137 : vector<8x64xf32>
    %139 = arith.mulf %130, %111 : vector<8x64xf32>
    %140 = arith.mulf %124, %132 : vector<8x64xf32>
    %141 = arith.addf %139, %140 : vector<8x64xf32>
    %142 = math.tanh %141 : vector<8x64xf32>
    %143 = arith.mulf %138, %142 : vector<8x64xf32>
    %144 = arith.addf %114, %143 : vector<8x64xf32>
    %145 = arith.truncf %143 : vector<8x64xf32> to vector<8x64xbf16>
    %cst_33 = arith.constant dense<0.000000e+00> : vector<8x256xf32>
    %146 = tpu.matmul %145, %9, %cst_33 {dimension_numbers = #tpu.dot_dimension_numbers<[1], [0], [0], [1], [0, 0, 1, 1], [], []>} : vector<8x64xbf16>, vector<64x256xbf16>, vector<8x256xf32> -> vector<8x256xf32>
    %147 = vector.extract_strided_slice %8 {offsets = [32, 0], sizes = [8, 256], strides = [1, 1]} : vector<64x256xf32> to vector<8x256xf32>
    %148 = arith.addf %147, %146 : vector<8x256xf32>
    %149 = vector.extract_strided_slice %148 {offsets = [0, 0], sizes = [8, 64], strides = [1, 1]} : vector<8x256xf32> to vector<8x64xf32>
    %150 = arith.negf %149 : vector<8x64xf32>
    %151 = math.exp %150 : vector<8x64xf32>
    %cst_34 = arith.constant 1.000000e+00 : f32
    %152 = vector.broadcast %cst_34 : f32 to vector<8x64xf32>
    %153 = arith.addf %152, %151 : vector<8x64xf32>
    %154 = arith.divf %152, %153 : vector<8x64xf32>
    %155 = vector.extract_strided_slice %148 {offsets = [0, 64], sizes = [8, 64], strides = [1, 1]} : vector<8x256xf32> to vector<8x64xf32>
    %156 = arith.negf %155 : vector<8x64xf32>
    %157 = math.exp %156 : vector<8x64xf32>
    %cst_35 = arith.constant 1.000000e+00 : f32
    %158 = vector.broadcast %cst_35 : f32 to vector<8x64xf32>
    %159 = arith.addf %158, %157 : vector<8x64xf32>
    %160 = arith.divf %158, %159 : vector<8x64xf32>
    %161 = vector.extract_strided_slice %148 {offsets = [0, 128], sizes = [8, 64], strides = [1, 1]} : vector<8x256xf32> to vector<8x64xf32>
    %162 = math.tanh %161 : vector<8x64xf32>
    %163 = vector.extract_strided_slice %148 {offsets = [0, 192], sizes = [8, 64], strides = [1, 1]} : vector<8x256xf32> to vector<8x64xf32>
    %164 = arith.negf %163 : vector<8x64xf32>
    %165 = math.exp %164 : vector<8x64xf32>
    %cst_36 = arith.constant 1.000000e+00 : f32
    %166 = vector.broadcast %cst_36 : f32 to vector<8x64xf32>
    %167 = arith.addf %166, %165 : vector<8x64xf32>
    %168 = arith.divf %166, %167 : vector<8x64xf32>
    %169 = arith.mulf %160, %141 : vector<8x64xf32>
    %170 = arith.mulf %154, %162 : vector<8x64xf32>
    %171 = arith.addf %169, %170 : vector<8x64xf32>
    %172 = math.tanh %171 : vector<8x64xf32>
    %173 = arith.mulf %168, %172 : vector<8x64xf32>
    %174 = arith.addf %144, %173 : vector<8x64xf32>
    %175 = arith.truncf %173 : vector<8x64xf32> to vector<8x64xbf16>
    %cst_37 = arith.constant dense<0.000000e+00> : vector<8x256xf32>
    %176 = tpu.matmul %175, %9, %cst_37 {dimension_numbers = #tpu.dot_dimension_numbers<[1], [0], [0], [1], [0, 0, 1, 1], [], []>} : vector<8x64xbf16>, vector<64x256xbf16>, vector<8x256xf32> -> vector<8x256xf32>
    %177 = vector.extract_strided_slice %8 {offsets = [40, 0], sizes = [8, 256], strides = [1, 1]} : vector<64x256xf32> to vector<8x256xf32>
    %178 = arith.addf %177, %176 : vector<8x256xf32>
    %179 = vector.extract_strided_slice %178 {offsets = [0, 0], sizes = [8, 64], strides = [1, 1]} : vector<8x256xf32> to vector<8x64xf32>
    %180 = arith.negf %179 : vector<8x64xf32>
    %181 = math.exp %180 : vector<8x64xf32>
    %cst_38 = arith.constant 1.000000e+00 : f32
    %182 = vector.broadcast %cst_38 : f32 to vector<8x64xf32>
    %183 = arith.addf %182, %181 : vector<8x64xf32>
    %184 = arith.divf %182, %183 : vector<8x64xf32>
    %185 = vector.extract_strided_slice %178 {offsets = [0, 64], sizes = [8, 64], strides = [1, 1]} : vector<8x256xf32> to vector<8x64xf32>
    %186 = arith.negf %185 : vector<8x64xf32>
    %187 = math.exp %186 : vector<8x64xf32>
    %cst_39 = arith.constant 1.000000e+00 : f32
    %188 = vector.broadcast %cst_39 : f32 to vector<8x64xf32>
    %189 = arith.addf %188, %187 : vector<8x64xf32>
    %190 = arith.divf %188, %189 : vector<8x64xf32>
    %191 = vector.extract_strided_slice %178 {offsets = [0, 128], sizes = [8, 64], strides = [1, 1]} : vector<8x256xf32> to vector<8x64xf32>
    %192 = math.tanh %191 : vector<8x64xf32>
    %193 = vector.extract_strided_slice %178 {offsets = [0, 192], sizes = [8, 64], strides = [1, 1]} : vector<8x256xf32> to vector<8x64xf32>
    %194 = arith.negf %193 : vector<8x64xf32>
    %195 = math.exp %194 : vector<8x64xf32>
    %cst_40 = arith.constant 1.000000e+00 : f32
    %196 = vector.broadcast %cst_40 : f32 to vector<8x64xf32>
    %197 = arith.addf %196, %195 : vector<8x64xf32>
    %198 = arith.divf %196, %197 : vector<8x64xf32>
    %199 = arith.mulf %190, %171 : vector<8x64xf32>
    %200 = arith.mulf %184, %192 : vector<8x64xf32>
    %201 = arith.addf %199, %200 : vector<8x64xf32>
    %202 = math.tanh %201 : vector<8x64xf32>
    %203 = arith.mulf %198, %202 : vector<8x64xf32>
    %204 = arith.addf %174, %203 : vector<8x64xf32>
    %205 = arith.truncf %203 : vector<8x64xf32> to vector<8x64xbf16>
    %cst_41 = arith.constant dense<0.000000e+00> : vector<8x256xf32>
    %206 = tpu.matmul %205, %9, %cst_41 {dimension_numbers = #tpu.dot_dimension_numbers<[1], [0], [0], [1], [0, 0, 1, 1], [], []>} : vector<8x64xbf16>, vector<64x256xbf16>, vector<8x256xf32> -> vector<8x256xf32>
    %207 = vector.extract_strided_slice %8 {offsets = [48, 0], sizes = [8, 256], strides = [1, 1]} : vector<64x256xf32> to vector<8x256xf32>
    %208 = arith.addf %207, %206 : vector<8x256xf32>
    %209 = vector.extract_strided_slice %208 {offsets = [0, 0], sizes = [8, 64], strides = [1, 1]} : vector<8x256xf32> to vector<8x64xf32>
    %210 = arith.negf %209 : vector<8x64xf32>
    %211 = math.exp %210 : vector<8x64xf32>
    %cst_42 = arith.constant 1.000000e+00 : f32
    %212 = vector.broadcast %cst_42 : f32 to vector<8x64xf32>
    %213 = arith.addf %212, %211 : vector<8x64xf32>
    %214 = arith.divf %212, %213 : vector<8x64xf32>
    %215 = vector.extract_strided_slice %208 {offsets = [0, 64], sizes = [8, 64], strides = [1, 1]} : vector<8x256xf32> to vector<8x64xf32>
    %216 = arith.negf %215 : vector<8x64xf32>
    %217 = math.exp %216 : vector<8x64xf32>
    %cst_43 = arith.constant 1.000000e+00 : f32
    %218 = vector.broadcast %cst_43 : f32 to vector<8x64xf32>
    %219 = arith.addf %218, %217 : vector<8x64xf32>
    %220 = arith.divf %218, %219 : vector<8x64xf32>
    %221 = vector.extract_strided_slice %208 {offsets = [0, 128], sizes = [8, 64], strides = [1, 1]} : vector<8x256xf32> to vector<8x64xf32>
    %222 = math.tanh %221 : vector<8x64xf32>
    %223 = vector.extract_strided_slice %208 {offsets = [0, 192], sizes = [8, 64], strides = [1, 1]} : vector<8x256xf32> to vector<8x64xf32>
    %224 = arith.negf %223 : vector<8x64xf32>
    %225 = math.exp %224 : vector<8x64xf32>
    %cst_44 = arith.constant 1.000000e+00 : f32
    %226 = vector.broadcast %cst_44 : f32 to vector<8x64xf32>
    %227 = arith.addf %226, %225 : vector<8x64xf32>
    %228 = arith.divf %226, %227 : vector<8x64xf32>
    %229 = arith.mulf %220, %201 : vector<8x64xf32>
    %230 = arith.mulf %214, %222 : vector<8x64xf32>
    %231 = arith.addf %229, %230 : vector<8x64xf32>
    %232 = math.tanh %231 : vector<8x64xf32>
    %233 = arith.mulf %228, %232 : vector<8x64xf32>
    %234 = arith.addf %204, %233 : vector<8x64xf32>
    %235 = arith.truncf %233 : vector<8x64xf32> to vector<8x64xbf16>
    %cst_45 = arith.constant dense<0.000000e+00> : vector<8x256xf32>
    %236 = tpu.matmul %235, %9, %cst_45 {dimension_numbers = #tpu.dot_dimension_numbers<[1], [0], [0], [1], [0, 0, 1, 1], [], []>} : vector<8x64xbf16>, vector<64x256xbf16>, vector<8x256xf32> -> vector<8x256xf32>
    %237 = vector.extract_strided_slice %8 {offsets = [56, 0], sizes = [8, 256], strides = [1, 1]} : vector<64x256xf32> to vector<8x256xf32>
    %238 = arith.addf %237, %236 : vector<8x256xf32>
    %239 = vector.extract_strided_slice %238 {offsets = [0, 0], sizes = [8, 64], strides = [1, 1]} : vector<8x256xf32> to vector<8x64xf32>
    %240 = arith.negf %239 : vector<8x64xf32>
    %241 = math.exp %240 : vector<8x64xf32>
    %cst_46 = arith.constant 1.000000e+00 : f32
    %242 = vector.broadcast %cst_46 : f32 to vector<8x64xf32>
    %243 = arith.addf %242, %241 : vector<8x64xf32>
    %244 = arith.divf %242, %243 : vector<8x64xf32>
    %245 = vector.extract_strided_slice %238 {offsets = [0, 64], sizes = [8, 64], strides = [1, 1]} : vector<8x256xf32> to vector<8x64xf32>
    %246 = arith.negf %245 : vector<8x64xf32>
    %247 = math.exp %246 : vector<8x64xf32>
    %cst_47 = arith.constant 1.000000e+00 : f32
    %248 = vector.broadcast %cst_47 : f32 to vector<8x64xf32>
    %249 = arith.addf %248, %247 : vector<8x64xf32>
    %250 = arith.divf %248, %249 : vector<8x64xf32>
    %251 = vector.extract_strided_slice %238 {offsets = [0, 128], sizes = [8, 64], strides = [1, 1]} : vector<8x256xf32> to vector<8x64xf32>
    %252 = math.tanh %251 : vector<8x64xf32>
    %253 = vector.extract_strided_slice %238 {offsets = [0, 192], sizes = [8, 64], strides = [1, 1]} : vector<8x256xf32> to vector<8x64xf32>
    %254 = arith.negf %253 : vector<8x64xf32>
    %255 = math.exp %254 : vector<8x64xf32>
    %cst_48 = arith.constant 1.000000e+00 : f32
    %256 = vector.broadcast %cst_48 : f32 to vector<8x64xf32>
    %257 = arith.addf %256, %255 : vector<8x64xf32>
    %258 = arith.divf %256, %257 : vector<8x64xf32>
    %259 = arith.mulf %250, %231 : vector<8x64xf32>
    %260 = arith.mulf %244, %252 : vector<8x64xf32>
    %261 = arith.addf %259, %260 : vector<8x64xf32>
    %262 = math.tanh %261 : vector<8x64xf32>
    %263 = arith.mulf %258, %262 : vector<8x64xf32>
    %264 = arith.addf %234, %263 : vector<8x64xf32>
    %265 = arith.truncf %263 : vector<8x64xf32> to vector<8x64xbf16>
    %cst_49 = arith.constant dense<0.000000e+00> : vector<8x256xf32>
    %266 = tpu.matmul %265, %9, %cst_49 {dimension_numbers = #tpu.dot_dimension_numbers<[1], [0], [0], [1], [0, 0, 1, 1], [], []>} : vector<8x64xbf16>, vector<64x256xbf16>, vector<8x256xf32> -> vector<8x256xf32>
    %267 = vector.extract_strided_slice %266 {offsets = [0, 0], sizes = [8, 64], strides = [1, 1]} : vector<8x256xf32> to vector<8x64xf32>
    %268 = arith.negf %267 : vector<8x64xf32>
    %269 = math.exp %268 : vector<8x64xf32>
    %cst_50 = arith.constant 1.000000e+00 : f32
    %270 = vector.broadcast %cst_50 : f32 to vector<8x64xf32>
    %271 = arith.addf %270, %269 : vector<8x64xf32>
    %272 = arith.divf %270, %271 : vector<8x64xf32>
    %273 = vector.extract_strided_slice %266 {offsets = [0, 64], sizes = [8, 64], strides = [1, 1]} : vector<8x256xf32> to vector<8x64xf32>
    %274 = arith.negf %273 : vector<8x64xf32>
    %275 = math.exp %274 : vector<8x64xf32>
    %cst_51 = arith.constant 1.000000e+00 : f32
    %276 = vector.broadcast %cst_51 : f32 to vector<8x64xf32>
    %277 = arith.addf %276, %275 : vector<8x64xf32>
    %278 = arith.divf %276, %277 : vector<8x64xf32>
    %279 = vector.extract_strided_slice %266 {offsets = [0, 128], sizes = [8, 64], strides = [1, 1]} : vector<8x256xf32> to vector<8x64xf32>
    %280 = math.tanh %279 : vector<8x64xf32>
    %281 = vector.extract_strided_slice %266 {offsets = [0, 192], sizes = [8, 64], strides = [1, 1]} : vector<8x256xf32> to vector<8x64xf32>
    %282 = arith.negf %281 : vector<8x64xf32>
    %283 = math.exp %282 : vector<8x64xf32>
    %cst_52 = arith.constant 1.000000e+00 : f32
    %284 = vector.broadcast %cst_52 : f32 to vector<8x64xf32>
    %285 = arith.addf %284, %283 : vector<8x64xf32>
    %286 = arith.divf %284, %285 : vector<8x64xf32>
    %287 = arith.mulf %278, %261 : vector<8x64xf32>
    %288 = arith.mulf %272, %280 : vector<8x64xf32>
    %289 = arith.addf %287, %288 : vector<8x64xf32>
    %290 = math.tanh %289 : vector<8x64xf32>
    %291 = arith.mulf %286, %290 : vector<8x64xf32>
    %292 = arith.addf %264, %291 : vector<8x64xf32>
    %293 = arith.select %12, %263, %291 : vector<8x64xi1>, vector<8x64xf32>
    %294 = arith.select %12, %261, %289 : vector<8x64xi1>, vector<8x64xf32>
    %295 = vector.extract_strided_slice %292 {offsets = [0, 32], sizes = [8, 32], strides = [1, 1]} : vector<8x64xf32> to vector<8x32xf32>
    %cst_53 = arith.constant 1.250000e-01 : f32
    %296 = vector.broadcast %cst_53 : f32 to vector<8x32xf32>
    %297 = arith.mulf %295, %296 : vector<8x32xf32>
    %298 = arith.truncf %297 : vector<8x32xf32> to vector<8x32xbf16>
    %c0_54 = arith.constant 0 : index
    %c0_55 = arith.constant 0 : index
    %299 = vector.load %arg3[%c0_54, %c0_55] : memref<32x128xbf16, #tpu.memory_space<vmem>>, vector<32x128xbf16>
    %cst_56 = arith.constant dense<0.000000e+00> : vector<8x128xf32>
    %300 = tpu.matmul %298, %299, %cst_56 {dimension_numbers = #tpu.dot_dimension_numbers<[1], [0], [0], [1], [0, 0, 1, 1], [], []>} : vector<8x32xbf16>, vector<32x128xbf16>, vector<8x128xf32> -> vector<8x128xf32>
    %c0_57 = arith.constant 0 : index
    %c0_58 = arith.constant 0 : index
    %301 = vector.load %arg4[%c0_57, %c0_58] : memref<1x128xf32, #tpu.memory_space<vmem>>, vector<1x128xf32>
    %302 = vector.broadcast %301 : vector<1x128xf32> to vector<8x128xf32>
    %303 = arith.addf %300, %302 : vector<8x128xf32>
    %c0_59 = arith.constant 0 : index
    %c0_60 = arith.constant 0 : index
    %304 = vector.load %arg7[%c0_59, %c0_60] : memref<8x128xf32, #tpu.memory_space<vmem>>, vector<8x128xf32>
    tpu.vector_store %arg7[%c0_59, %c0_60], %303 {strides = array<i32>} : memref<8x128xf32, #tpu.memory_space<vmem>>, vector<8x128xf32>,
    %305 = tpu.concatenate %293, %294 in 1 : vector<8x64xf32>, vector<8x64xf32> -> vector<8x128xf32>
    %c0_61 = arith.constant 0 : index
    %c0_62 = arith.constant 0 : index
    %306 = vector.load %arg8[%c0_61, %c0_62] : memref<8x128xf32, #tpu.memory_space<vmem>>, vector<8x128xf32>
    tpu.vector_store %arg8[%c0_61, %c0_62], %305 {strides = array<i32>} : memref<8x128xf32, #tpu.memory_space<vmem>>, vector<8x128xf32>,
    return
  }
}

</mosaic_0001>

<llo_original>
// kernel: basic_rnn_forward.1
$region0: #{basic_rnn_forward.1}
  #allocation0 [shape = 'u32[]', space=smem, size = 0x4, offset = 0x4, fixed_abs, tag = 'smem constant byte address 0x4 - core index']
  #allocation1 [shape = 'u32[72,128]{1,0:T(1,128)}', space=vmem, size = 0x9000, scoped, tag = 'internal scratch']
  %s0 = inlined_call_operand.vmem [shape: s32[64,1], index: 0, kind: input, shape index: {}]
  %s1 = inlined_call_operand.hbm [shape: bf16[128,256], index: 1, kind: input, shape index: {}]
  %s2 = inlined_call_operand.vmem [shape: bf16[64,256], index: 2, kind: input, shape index: {}]
  %s3 = inlined_call_operand.vmem [shape: bf16[32,128], index: 3, kind: input, shape index: {}]
  %s4 = inlined_call_operand.vmem [shape: f32[1,128], index: 4, kind: input, shape index: {}]
  %s5 = inlined_call_operand.vmem [shape: f32[2,8,32], index: 5, kind: input, shape index: {}]
  %s6 = inlined_call_operand.vmem [shape: f32[2,8,32], index: 6, kind: input, shape index: {}]
  %s7 = inlined_call_operand.vmem [shape: f32[8,128], index: 7, kind: output, shape index: {0}]
  %s8 = inlined_call_operand.vmem [shape: f32[8,128], index: 8, kind: output, shape index: {1}]
  %9 = xla_tuple %s7, %s8
  %s10 = sld [smem:[#allocation0]]
  $region50: #{basic_rnn_forward.1} parent=0
    _
  %s12 = ssub.s32 1, %s10
  %s13 = scalar_select 0, %s12, %s10
  $region1: #{basic_rnn_forward.1} parent=0
    #allocation2 [shape = 'u8[65536]{0}', space=vmem, size = 0x10000, scoped, tag = 'input window, operand 1, single buffered']
    #allocation3 [shape = 's32[1]{0}', space=sflag, size = 0x4, scoped, tag = 'scoped memory for basic_rnn_forward.1']
    %14 = vsyncpa [#allocation3], 0
    // Predicated region
    $region2: #{basic_rnn_forward.1} parent=1 // pred_check
      _
    $region3: #{basic_rnn_forward.1} parent=1 // pred_check_branch
      %16 = sbr.rel (0) target = $region5
    $region4: #{basic_rnn_forward.1} parent=1 // pred_region
      _
    $region5: #{basic_rnn_forward.1} parent=1 // pred_fallthru
      _
    // Predicated region
    $region6: #{basic_rnn_forward.1} parent=1 // pred_check
      _
    $region7: #{basic_rnn_forward.1} parent=1 // pred_check_branch
      %18 = sbr.rel (0) target = $region9
    $region8: #{basic_rnn_forward.1} parent=1 // pred_region
      %20 = vsyncadd [#allocation3], 0
      %s21 = sshll.u32 %s1, 4
      %s22 = int_to_ptr.hbm [resolvable:$true] %s21
      %s23 = sshll.u32 [#allocation2], 4
      %s24 = int_to_ptr.vmem [resolvable:$true] %s23
      %29 = dma.hbm_to_vmem [thread:$0]  %s22, 2048, %s24, [#allocation3], 128, 128, 8
    $region9: #{basic_rnn_forward.1} parent=1 // pred_fallthru
      _
    // Predicated region
    $region10: #{basic_rnn_forward.1} parent=1 // pred_check
      _
    $region11: #{basic_rnn_forward.1} parent=1 // pred_check_branch
      %31 = sbr.rel (0) target = $region13
    $region12: #{basic_rnn_forward.1} parent=1 // pred_region
      _
    $region13: #{basic_rnn_forward.1} parent=1 // pred_fallthru
      _
    // Predicated region
    $region14: #{basic_rnn_forward.1} parent=1 // pred_check
      _
    $region15: #{basic_rnn_forward.1} parent=1 // pred_check_branch
      %33 = sbr.rel (0) target = $region17
    $region16: #{basic_rnn_forward.1} parent=1 // pred_region
      _
    $region17: #{basic_rnn_forward.1} parent=1 // pred_fallthru
      _
    // Predicated region
    $region18: #{basic_rnn_forward.1} parent=1 // pred_check
      _
    $region19: #{basic_rnn_forward.1} parent=1 // pred_check_branch
      %35 = sbr.rel (0) target = $region21
    $region20: #{basic_rnn_forward.1} parent=1 // pred_region
      _
    $region21: #{basic_rnn_forward.1} parent=1 // pred_fallthru
      _
    // Predicated region
    $region22: #{basic_rnn_forward.1} parent=1 // pred_check
      _
    $region23: #{basic_rnn_forward.1} parent=1 // pred_check_branch
      %37 = sbr.rel (0) target = $region25
    $region24: #{basic_rnn_forward.1} parent=1 // pred_region
      _
    $region25: #{basic_rnn_forward.1} parent=1 // pred_fallthru
      _
    // Predicated region
    $region26: #{basic_rnn_forward.1} parent=1 // pred_check
      _
    $region27: #{basic_rnn_forward.1} parent=1 // pred_check_branch
      %39 = sbr.rel (0) target = $region29
    $region28: #{basic_rnn_forward.1} parent=1 // pred_region
      _
    $region29: #{basic_rnn_forward.1} parent=1 // pred_fallthru
      _
    // Predicated region
    $region30: #{basic_rnn_forward.1} parent=1 // pred_check
      _
    $region31: #{basic_rnn_forward.1} parent=1 // pred_check_branch
      %41 = sbr.rel (0) target = $region33
    $region32: #{basic_rnn_forward.1} parent=1 // pred_region
      %43 = dma.done [#allocation3], 2048
    $region33: #{basic_rnn_forward.1} parent=1 // pred_fallthru
      _
    %v45 = vld [vmem:[%s0] sm:$0xff]
    %v46 = vld [vmem:[%s0 + $0x8] sm:$0xff]
    %v47 = vld [vmem:[%s0 + $0x10] sm:$0xff]
    %v48 = vld [vmem:[%s0 + $0x18] sm:$0xff]
    %v49 = vld [vmem:[%s0 + $0x20] sm:$0xff]
    %v50 = vld [vmem:[%s0 + $0x28] sm:$0xff]
    %v51 = vld [vmem:[%s0 + $0x30] sm:$0xff]
    %v52 = vld [vmem:[%s0 + $0x38] sm:$0xff]
    %v53 = vlaneseq
    %v54 = vand.u32 %v53, 127
    %55 = vset.pattern.permute.xlu0 0
    %56 = vperm.xlu0 %55, %v45
    %v57 = vpop.permute.xlu0 %56
    %58 = vset.pattern.permute.xlu0 0
    %59 = vperm.xlu0 %58, %v46
    %v60 = vpop.permute.xlu0 %59
    %61 = vset.pattern.permute.xlu0 0
    %62 = vperm.xlu0 %61, %v47
    %v63 = vpop.permute.xlu0 %62
    %64 = vset.pattern.permute.xlu0 0
    %65 = vperm.xlu0 %64, %v48
    %v66 = vpop.permute.xlu0 %65
    %67 = vset.pattern.permute.xlu0 0
    %68 = vperm.xlu0 %67, %v49
    %v69 = vpop.permute.xlu0 %68
    %70 = vset.pattern.permute.xlu0 0
    %71 = vperm.xlu0 %70, %v50
    %v72 = vpop.permute.xlu0 %71
    %73 = vset.pattern.permute.xlu0 0
    %74 = vperm.xlu0 %73, %v51
    %v75 = vpop.permute.xlu0 %74
    %76 = vset.pattern.permute.xlu0 0
    %77 = vperm.xlu0 %76, %v52
    %v78 = vpop.permute.xlu0 %77
    %vm79 = vcmp.eq.s32.totalorder %v54, %v57
    %vm80 = vcmp.eq.s32.totalorder %v54, %v60
    %vm81 = vcmp.eq.s32.totalorder %v54, %v63
    %vm82 = vcmp.eq.s32.totalorder %v54, %v66
    %vm83 = vcmp.eq.s32.totalorder %v54, %v69
    %vm84 = vcmp.eq.s32.totalorder %v54, %v72
    %vm85 = vcmp.eq.s32.totalorder %v54, %v75
    %vm86 = vcmp.eq.s32.totalorder %v54, %v78
    %v87 = vsel %vm79, 1, 0
    %v88 = vsel %vm80, 1, 0
    %v89 = vsel %vm81, 1, 0
    %v90 = vsel %vm82, 1, 0
    %v91 = vsel %vm83, 1, 0
    %v92 = vsel %vm84, 1, 0
    %v93 = vsel %vm85, 1, 0
    %v94 = vsel %vm86, 1, 0
    %v95 = vcvt.s32.f32 %v87
    %v96 = vcvt.s32.f32 %v88
    %v97 = vcvt.s32.f32 %v89
    %v98 = vcvt.s32.f32 %v90
    %v99 = vcvt.s32.f32 %v91
    %v100 = vcvt.s32.f32 %v92
    %v101 = vcvt.s32.f32 %v93
    %v102 = vcvt.s32.f32 %v94
    %v103 = vpack.c.bf16 %v96, %v95
    %v104 = vpack.c.bf16 %v98, %v97
    %v105 = vpack.c.bf16 %v100, %v99
    %v106 = vpack.c.bf16 %v102, %v101
    %v107 = vld [vmem:[#allocation2] sm:$0xff]
    %v108 = vld [vmem:[#allocation2 + $0x8] sm:$0xff]
    %v109 = vld [vmem:[#allocation2 + $0x10] sm:$0xff]
    %v110 = vld [vmem:[#allocation2 + $0x18] sm:$0xff]
    %v111 = vld [vmem:[#allocation2 + $0x20] sm:$0xff]
    %v112 = vld [vmem:[#allocation2 + $0x28] sm:$0xff]
    %v113 = vld [vmem:[#allocation2 + $0x30] sm:$0xff]
    %v114 = vld [vmem:[#allocation2 + $0x38] sm:$0xff]
    %v115 = vld [vmem:[#allocation2 + $0x40] sm:$0xff]
    %v116 = vld [vmem:[#allocation2 + $0x48] sm:$0xff]
    %v117 = vld [vmem:[#allocation2 + $0x50] sm:$0xff]
    %v118 = vld [vmem:[#allocation2 + $0x58] sm:$0xff]
    %v119 = vld [vmem:[#allocation2 + $0x60] sm:$0xff]
    %v120 = vld [vmem:[#allocation2 + $0x68] sm:$0xff]
    %v121 = vld [vmem:[#allocation2 + $0x70] sm:$0xff]
    %v122 = vld [vmem:[#allocation2 + $0x78] sm:$0xff]
    %v139 = vunpack.c.l.b16 %v107
    %v140 = vunpack.c.h.b16 %v107
    %v141 = vunpack.c.l.b16 %v108
    %v142 = vunpack.c.h.b16 %v108
    %v143 = vunpack.c.l.b16 %v109
    %v144 = vunpack.c.h.b16 %v109
    %v145 = vunpack.c.l.b16 %v110
    %v146 = vunpack.c.h.b16 %v110
    %v147 = vunpack.c.l.b16 %v111
    %v148 = vunpack.c.h.b16 %v111
    %v149 = vunpack.c.l.b16 %v112
    %v150 = vunpack.c.h.b16 %v112
    %v151 = vunpack.c.l.b16 %v113
    %v152 = vunpack.c.h.b16 %v113
    %v153 = vunpack.c.l.b16 %v114
    %v154 = vunpack.c.h.b16 %v114
    %v155 = vunpack.c.l.b16 %v115
    %v156 = vunpack.c.h.b16 %v115
    %v157 = vunpack.c.l.b16 %v116
    %v158 = vunpack.c.h.b16 %v116
    %v159 = vunpack.c.l.b16 %v117
    %v160 = vunpack.c.h.b16 %v117
    %v161 = vunpack.c.l.b16 %v118
    %v162 = vunpack.c.h.b16 %v118
    %v163 = vunpack.c.l.b16 %v119
    %v164 = vunpack.c.h.b16 %v119
    %v165 = vunpack.c.l.b16 %v120
    %v166 = vunpack.c.h.b16 %v120
    %v167 = vunpack.c.l.b16 %v121
    %v168 = vunpack.c.h.b16 %v121
    %v169 = vunpack.c.l.b16 %v122
    %v170 = vunpack.c.h.b16 %v122
    %v171 = vpack.c.b16 %v141, %v139
    %v172 = vpack.c.b16 %v142, %v140
    %v173 = vpack.c.b16 %v145, %v143
    %v174 = vpack.c.b16 %v146, %v144
    %v175 = vpack.c.b16 %v149, %v147
    %v176 = vpack.c.b16 %v150, %v148
    %v177 = vpack.c.b16 %v153, %v151
    %v178 = vpack.c.b16 %v154, %v152
    %v179 = vpack.c.b16 %v157, %v155
    %v180 = vpack.c.b16 %v158, %v156
    %v181 = vpack.c.b16 %v161, %v159
    %v182 = vpack.c.b16 %v162, %v160
    %v183 = vpack.c.b16 %v165, %v163
    %v184 = vpack.c.b16 %v166, %v164
    %v185 = vpack.c.b16 %v169, %v167
    %v186 = vpack.c.b16 %v170, %v168
    %203 = vmatpush.bf16.msra.mxu0 %v185
    %204 = vmatpush.bf16.msra.mxu0 %v183
    %205 = vmatpush.bf16.msra.mxu0 %v181
    %206 = vmatpush.bf16.msra.mxu0 %v179
    %207 = vmatpush.bf16.msra.mxu0 %v177
    %208 = vmatpush.bf16.msra.mxu0 %v175
    %209 = vmatpush.bf16.msra.mxu0 %v173
    %210 = vmatpush.bf16.msra.mxu0 %v171
    %211 = vmatmul.bf16.gmra.mxu0 %v103
    %v212 = vpop.f32.mrf.mxu0
    %v213 = vadd.f32 0.0, %v212
    %v214 = vpop.f32.mrf.mxu0
    %v215 = vadd.f32 0.0, %v214
    %216 = vmatmul.bf16.gmra.mxu0 %v104
    %v217 = vpop.f32.mrf.mxu0
    %v218 = vadd.f32 0.0, %v217
    %v219 = vpop.f32.mrf.mxu0
    %v220 = vadd.f32 0.0, %v219
    %221 = vmatmul.bf16.gmra.mxu0 %v105
    %v222 = vpop.f32.mrf.mxu0
    %v223 = vadd.f32 0.0, %v222
    %v224 = vpop.f32.mrf.mxu0
    %v225 = vadd.f32 0.0, %v224
    %226 = vmatmul.bf16.gmra.mxu0 %v106
    %v227 = vpop.f32.mrf.mxu0
    %v228 = vadd.f32 0.0, %v227
    %v229 = vpop.f32.mrf.mxu0
    %v230 = vadd.f32 0.0, %v229
    %231 = vdwg.mxu0
    %232 = vmatpush.bf16.msra.mxu0 %v186
    %233 = vmatpush.bf16.msra.mxu0 %v184
    %234 = vmatpush.bf16.msra.mxu0 %v182
    %235 = vmatpush.bf16.msra.mxu0 %v180
    %236 = vmatpush.bf16.msra.mxu0 %v178
    %237 = vmatpush.bf16.msra.mxu0 %v176
    %238 = vmatpush.bf16.msra.mxu0 %v174
    %239 = vmatpush.bf16.msra.mxu0 %v172
    %240 = vmatmul.bf16.gmra.mxu0 %v103
    %v241 = vpop.f32.mrf.mxu0
    %v242 = vadd.f32 0.0, %v241
    %v243 = vpop.f32.mrf.mxu0
    %v244 = vadd.f32 0.0, %v243
    %245 = vmatmul.bf16.gmra.mxu0 %v104
    %v246 = vpop.f32.mrf.mxu0
    %v247 = vadd.f32 0.0, %v246
    %v248 = vpop.f32.mrf.mxu0
    %v249 = vadd.f32 0.0, %v248
    %250 = vmatmul.bf16.gmra.mxu0 %v105
    %v251 = vpop.f32.mrf.mxu0
    %v252 = vadd.f32 0.0, %v251
    %v253 = vpop.f32.mrf.mxu0
    %v254 = vadd.f32 0.0, %v253
    %255 = vmatmul.bf16.gmra.mxu0 %v106
    %v256 = vpop.f32.mrf.mxu0
    %v257 = vadd.f32 0.0, %v256
    %v258 = vpop.f32.mrf.mxu0
    %v259 = vadd.f32 0.0, %v258
    %260 = vdwg.mxu0
    %v261 = vld [vmem:[%s2] sm:$0xff]
    %v262 = vld [vmem:[%s2 + $0x8] sm:$0xff]
    %v263 = vld [vmem:[%s2 + $0x10] sm:$0xff]
    %v264 = vld [vmem:[%s2 + $0x18] sm:$0xff]
    %v265 = vld [vmem:[%s2 + $0x20] sm:$0xff]
    %v266 = vld [vmem:[%s2 + $0x28] sm:$0xff]
    %v267 = vld [vmem:[%s2 + $0x30] sm:$0xff]
    %v268 = vld [vmem:[%s2 + $0x38] sm:$0xff]
    %vm269 = vcmp.lt.s32.totalorder %v54, 32
    %v270 = vld [vmem:[%s5] sm:$0xff]
    %s271 = scalar_lea.vmem %s5, 8
    %v272 = vld [vmem:[%s271] sm:$0xff]
    %274 = vrot.lane.b32.xlu0 %v272, 32
    %v275 = vpop.permute.xlu0 %274
    %vm277 = vcmask 261120
    %v278 = vsel %vm277, %v270, %v275
    %v279 = vld [vmem:[%s6] sm:$0xff]
    %s280 = scalar_lea.vmem %s6, 8
    %v281 = vld [vmem:[%s280] sm:$0xff]
    %283 = vrot.lane.b32.xlu0 %v281, 32
    %v284 = vpop.permute.xlu0 %283
    %v286 = vsel %vm277, %v279, %v284
    %v287 = vpack.c.bf16 %v278, %v278
    %v296 = vunpack.c.l.b16 %v261
    %v297 = vunpack.c.h.b16 %v261
    %v298 = vunpack.c.l.b16 %v262
    %v299 = vunpack.c.h.b16 %v262
    %v300 = vunpack.c.l.b16 %v263
    %v301 = vunpack.c.h.b16 %v263
    %v302 = vunpack.c.l.b16 %v264
    %v303 = vunpack.c.h.b16 %v264
    %v304 = vunpack.c.l.b16 %v265
    %v305 = vunpack.c.h.b16 %v265
    %v306 = vunpack.c.l.b16 %v266
    %v307 = vunpack.c.h.b16 %v266
    %v308 = vunpack.c.l.b16 %v267
    %v309 = vunpack.c.h.b16 %v267
    %v310 = vunpack.c.l.b16 %v268
    %v311 = vunpack.c.h.b16 %v268
    %v312 = vpack.c.b16 %v298, %v296
    %v313 = vpack.c.b16 %v299, %v297
    %v314 = vpack.c.b16 %v302, %v300
    %v315 = vpack.c.b16 %v303, %v301
    %v316 = vpack.c.b16 %v306, %v304
    %v317 = vpack.c.b16 %v307, %v305
    %v318 = vpack.c.b16 %v310, %v308
    %v319 = vpack.c.b16 %v311, %v309
    %vm328 = vcmask 523264
    %v330 = vsel %vm328, %v287, 0
    %332 = vmatpush.bf16.msra.mxu0 0
    %333 = vmatpush.bf16.msra.mxu0 0
    %334 = vmatpush.bf16.msra.mxu0 0
    %335 = vmatpush.bf16.msra.mxu0 0
    %336 = vmatpush.bf16.msra.mxu0 %v318
    %337 = vmatpush.bf16.msra.mxu0 %v316
    %338 = vmatpush.bf16.msra.mxu0 %v314
    %339 = vmatpush.bf16.msra.mxu0 %v312
    %340 = vmatmul.bf16.gmra.mxu0 %v330
    %v341 = vpop.f32.mrf.mxu0
    %v342 = vadd.f32 0.0, %v341
    %v343 = vpop.f32.mrf.mxu0
    %344 = vdwg.mxu0
    %345 = vmatpush.bf16.msra.mxu0 0
    %346 = vmatpush.bf16.msra.mxu0 0
    %347 = vmatpush.bf16.msra.mxu0 0
    %348 = vmatpush.bf16.msra.mxu0 0
    %349 = vmatpush.bf16.msra.mxu0 %v319
    %350 = vmatpush.bf16.msra.mxu0 %v317
    %351 = vmatpush.bf16.msra.mxu0 %v315
    %352 = vmatpush.bf16.msra.mxu0 %v313
    %353 = vmatmul.bf16.gmra.mxu0 %v330
    %v354 = vpop.f32.mrf.mxu0
    %v355 = vadd.f32 0.0, %v354
    %v356 = vpop.f32.mrf.mxu0
    %357 = vdwg.mxu0
    %v358 = vadd.f32 %v213, %v342
    %v359 = vadd.f32 %v242, %v355
    %v360 = vxor.u32 %v358, 2147483648
    %v361 = vmul.f32 %v360, 1.442695
    %v362 = vpow.pop %v361
    %v363 = vadd.f32 %v362, 1.0
    %v364 = vrcp.pop %v363
    %v365 = vmul.f32 %v363, %v364
    %v366 = vsub.f32 1.0, %v365
    %v367 = vmul.f32 %v364, %v366
    %v368 = vadd.f32 %v364, %v367
    %vm369 = vweird.f32 %v363
    %vm370 = vweird.f32 %v364
    %vm371 = vmor %vm369, %vm370
    %v372 = vsel %vm371, %v364, %v368
    %v373 = vand.u32 2147483647, %v363
    %vm374 = vcmp.eq.f32.partialorder %v373, 8.507059e+37
    %v375 = vand.u32 %v363, 2147483648
    %v376 = vor.u32 1.1754944e-38, %v375
    %v377 = vsel %vm374, %v376, %v372
    %v378 = vmul.f32 1.0, %v377
    %v379 = vtanh.pop %v359
    %v380 = vxor.u32 %v359, 2147483648
    %v381 = vmul.f32 %v380, 1.442695
    %v382 = vpow.pop %v381
    %v383 = vadd.f32 %v382, 1.0
    %v384 = vrcp.pop %v383
    %v385 = vmul.f32 %v383, %v384
    %v386 = vsub.f32 1.0, %v385
    %v387 = vmul.f32 %v384, %v386
    %v388 = vadd.f32 %v384, %v387
    %vm389 = vweird.f32 %v383
    %vm390 = vweird.f32 %v384
    %vm391 = vmor %vm389, %vm390
    %v392 = vsel %vm391, %v384, %v388
    %v393 = vand.u32 2147483647, %v383
    %vm394 = vcmp.eq.f32.partialorder %v393, 8.507059e+37
    %v395 = vand.u32 %v383, 2147483648
    %v396 = vor.u32 1.1754944e-38, %v395
    %v397 = vsel %vm394, %v396, %v392
    %v398 = vmul.f32 1.0, %v397
    %400 = vrot.lane.b32.xlu0 %v286, 64
    %v401 = vpop.permute.xlu0 %400
    %v403 = vmul.f32 %v378, %v401
    %v404 = vmul.f32 %v378, %v379
    %406 = vrot.lane.b32.xlu0 %v404, 64
    %v407 = vpop.permute.xlu0 %406
    %v409 = vadd.f32 %v403, %v407
    %v410 = vtanh.pop %v409
    %v411 = vmul.f32 %v398, %v410
    %413 = vrot.lane.b32.xlu0 %v411, 64
    %v414 = vpop.permute.xlu0 %413
    %v416 = vsel %vm269, %v414, %v278
    %418 = vrot.lane.b32.xlu0 %v409, 64
    %v419 = vpop.permute.xlu0 %418
    %v421 = vsel %vm269, %v419, %v286
    %v422 = vpack.c.bf16 %v416, %v416
    %v424 = vsel %vm328, %v422, 0
    %426 = vmatpush.bf16.msra.mxu0 0
    %427 = vmatpush.bf16.msra.mxu0 0
    %428 = vmatpush.bf16.msra.mxu0 0
    %429 = vmatpush.bf16.msra.mxu0 0
    %430 = vmatpush.bf16.msra.mxu0 %v318
    %431 = vmatpush.bf16.msra.mxu0 %v316
    %432 = vmatpush.bf16.msra.mxu0 %v314
    %433 = vmatpush.bf16.msra.mxu0 %v312
    %434 = vmatmul.bf16.gmra.mxu0 %v424
    %v435 = vpop.f32.mrf.mxu0
    %v436 = vadd.f32 0.0, %v435
    %v437 = vpop.f32.mrf.mxu0
    %438 = vdwg.mxu0
    %439 = vmatpush.bf16.msra.mxu0 0
    %440 = vmatpush.bf16.msra.mxu0 0
    %441 = vmatpush.bf16.msra.mxu0 0
    %442 = vmatpush.bf16.msra.mxu0 0
    %443 = vmatpush.bf16.msra.mxu0 %v319
    %444 = vmatpush.bf16.msra.mxu0 %v317
    %445 = vmatpush.bf16.msra.mxu0 %v315
    %446 = vmatpush.bf16.msra.mxu0 %v313
    %447 = vmatmul.bf16.gmra.mxu0 %v424
    %v448 = vpop.f32.mrf.mxu0
    %v449 = vadd.f32 0.0, %v448
    %v450 = vpop.f32.mrf.mxu0
    %451 = vdwg.mxu0
    %v452 = vadd.f32 %v215, %v436
    %v453 = vadd.f32 %v244, %v449
    %v454 = vxor.u32 %v452, 2147483648
    %v455 = vmul.f32 %v454, 1.442695
    %v456 = vpow.pop %v455
    %v457 = vadd.f32 %v456, 1.0
    %v458 = vrcp.pop %v457
    %v459 = vmul.f32 %v457, %v458
    %v460 = vsub.f32 1.0, %v459
    %v461 = vmul.f32 %v458, %v460
    %v462 = vadd.f32 %v458, %v461
    %vm463 = vweird.f32 %v457
    %vm464 = vweird.f32 %v458
    %vm465 = vmor %vm463, %vm464
    %v466 = vsel %vm465, %v458, %v462
    %v467 = vand.u32 2147483647, %v457
    %vm468 = vcmp.eq.f32.partialorder %v467, 8.507059e+37
    %v469 = vand.u32 %v457, 2147483648
    %v470 = vor.u32 1.1754944e-38, %v469
    %v471 = vsel %vm468, %v470, %v466
    %v472 = vmul.f32 1.0, %v471
    %v473 = vtanh.pop %v453
    %v474 = vxor.u32 %v453, 2147483648
    %v475 = vmul.f32 %v474, 1.442695
    %v476 = vpow.pop %v475
    %v477 = vadd.f32 %v476, 1.0
    %v478 = vrcp.pop %v477
    %v479 = vmul.f32 %v477, %v478
    %v480 = vsub.f32 1.0, %v479
    %v481 = vmul.f32 %v478, %v480
    %v482 = vadd.f32 %v478, %v481
    %vm483 = vweird.f32 %v477
    %vm484 = vweird.f32 %v478
    %vm485 = vmor %vm483, %vm484
    %v486 = vsel %vm485, %v478, %v482
    %v487 = vand.u32 2147483647, %v477
    %vm488 = vcmp.eq.f32.partialorder %v487, 8.507059e+37
    %v489 = vand.u32 %v477, 2147483648
    %v490 = vor.u32 1.1754944e-38, %v489
    %v491 = vsel %vm488, %v490, %v486
    %v492 = vmul.f32 1.0, %v491
    %494 = vrot.lane.b32.xlu0 %v421, 64
    %v495 = vpop.permute.xlu0 %494
    %v497 = vmul.f32 %v472, %v495
    %v498 = vmul.f32 %v472, %v473
    %500 = vrot.lane.b32.xlu0 %v498, 64
    %v501 = vpop.permute.xlu0 %500
    %v503 = vadd.f32 %v497, %v501
    %v504 = vtanh.pop %v503
    %v505 = vmul.f32 %v492, %v504
    %v506 = vadd.f32 %v505, 0.0
    %v507 = vpack.c.bf16 %v505, %v505
    %509 = vrot.lane.b32.xlu0 %v507, 64
    %v510 = vpop.permute.xlu0 %509
    %v512 = vsel %vm328, %v510, 0
    %514 = vmatpush.bf16.msra.mxu0 0
    %515 = vmatpush.bf16.msra.mxu0 0
    %516 = vmatpush.bf16.msra.mxu0 0
    %517 = vmatpush.bf16.msra.mxu0 0
    %518 = vmatpush.bf16.msra.mxu0 %v318
    %519 = vmatpush.bf16.msra.mxu0 %v316
    %520 = vmatpush.bf16.msra.mxu0 %v314
    %521 = vmatpush.bf16.msra.mxu0 %v312
    %522 = vmatmul.bf16.gmra.mxu0 %v512
    %v523 = vpop.f32.mrf.mxu0
    %v524 = vadd.f32 0.0, %v523
    %v525 = vpop.f32.mrf.mxu0
    %526 = vdwg.mxu0
    %527 = vmatpush.bf16.msra.mxu0 0
    %528 = vmatpush.bf16.msra.mxu0 0
    %529 = vmatpush.bf16.msra.mxu0 0
    %530 = vmatpush.bf16.msra.mxu0 0
    %531 = vmatpush.bf16.msra.mxu0 %v319
    %532 = vmatpush.bf16.msra.mxu0 %v317
    %533 = vmatpush.bf16.msra.mxu0 %v315
    %534 = vmatpush.bf16.msra.mxu0 %v313
    %535 = vmatmul.bf16.gmra.mxu0 %v512
    %v536 = vpop.f32.mrf.mxu0
    %v537 = vadd.f32 0.0, %v536
    %v538 = vpop.f32.mrf.mxu0
    %539 = vdwg.mxu0
    %v540 = vadd.f32 %v218, %v524
    %v541 = vadd.f32 %v247, %v537
    %v542 = vxor.u32 %v540, 2147483648
    %v543 = vmul.f32 %v542, 1.442695
    %v544 = vpow.pop %v543
    %v545 = vadd.f32 %v544, 1.0
    %v546 = vrcp.pop %v545
    %v547 = vmul.f32 %v545, %v546
    %v548 = vsub.f32 1.0, %v547
    %v549 = vmul.f32 %v546, %v548
    %v550 = vadd.f32 %v546, %v549
    %vm551 = vweird.f32 %v545
    %vm552 = vweird.f32 %v546
    %vm553 = vmor %vm551, %vm552
    %v554 = vsel %vm553, %v546, %v550
    %v555 = vand.u32 2147483647, %v545
    %vm556 = vcmp.eq.f32.partialorder %v555, 8.507059e+37
    %v557 = vand.u32 %v545, 2147483648
    %v558 = vor.u32 1.1754944e-38, %v557
    %v559 = vsel %vm556, %v558, %v554
    %v560 = vmul.f32 1.0, %v559
    %v561 = vtanh.pop %v541
    %v562 = vxor.u32 %v541, 2147483648
    %v563 = vmul.f32 %v562, 1.442695
    %v564 = vpow.pop %v563
    %v565 = vadd.f32 %v564, 1.0
    %v566 = vrcp.pop %v565
    %v567 = vmul.f32 %v565, %v566
    %v568 = vsub.f32 1.0, %v567
    %v569 = vmul.f32 %v566, %v568
    %v570 = vadd.f32 %v566, %v569
    %vm571 = vweird.f32 %v565
    %vm572 = vweird.f32 %v566
    %vm573 = vmor %vm571, %vm572
    %v574 = vsel %vm573, %v566, %v570
    %v575 = vand.u32 2147483647, %v565
    %vm576 = vcmp.eq.f32.partialorder %v575, 8.507059e+37
    %v577 = vand.u32 %v565, 2147483648
    %v578 = vor.u32 1.1754944e-38, %v577
    %v579 = vsel %vm576, %v578, %v574
    %v580 = vmul.f32 1.0, %v579
    %v581 = vmul.f32 %v560, %v503
    %v582 = vmul.f32 %v560, %v561
    %584 = vrot.lane.b32.xlu0 %v582, 64
    %v585 = vpop.permute.xlu0 %584
    %v587 = vadd.f32 %v581, %v585
    %v588 = vtanh.pop %v587
    %v589 = vmul.f32 %v580, %v588
    %v590 = vadd.f32 %v506, %v589
    %v591 = vpack.c.bf16 %v589, %v589
    %593 = vrot.lane.b32.xlu0 %v591, 64
    %v594 = vpop.permute.xlu0 %593
    %v596 = vsel %vm328, %v594, 0
    %598 = vmatpush.bf16.msra.mxu0 0
    %599 = vmatpush.bf16.msra.mxu0 0
    %600 = vmatpush.bf16.msra.mxu0 0
    %601 = vmatpush.bf16.msra.mxu0 0
    %602 = vmatpush.bf16.msra.mxu0 %v318
    %603 = vmatpush.bf16.msra.mxu0 %v316
    %604 = vmatpush.bf16.msra.mxu0 %v314
    %605 = vmatpush.bf16.msra.mxu0 %v312
    %606 = vmatmul.bf16.gmra.mxu0 %v596
    %v607 = vpop.f32.mrf.mxu0
    %v608 = vadd.f32 0.0, %v607
    %v609 = vpop.f32.mrf.mxu0
    %610 = vdwg.mxu0
    %611 = vmatpush.bf16.msra.mxu0 0
    %612 = vmatpush.bf16.msra.mxu0 0
    %613 = vmatpush.bf16.msra.mxu0 0
    %614 = vmatpush.bf16.msra.mxu0 0
    %615 = vmatpush.bf16.msra.mxu0 %v319
    %616 = vmatpush.bf16.msra.mxu0 %v317
    %617 = vmatpush.bf16.msra.mxu0 %v315
    %618 = vmatpush.bf16.msra.mxu0 %v313
    %619 = vmatmul.bf16.gmra.mxu0 %v596
    %v620 = vpop.f32.mrf.mxu0
    %v621 = vadd.f32 0.0, %v620
    %v622 = vpop.f32.mrf.mxu0
    %623 = vdwg.mxu0
    %v624 = vadd.f32 %v220, %v608
    %v625 = vadd.f32 %v249, %v621
    %v626 = vxor.u32 %v624, 2147483648
    %v627 = vmul.f32 %v626, 1.442695
    %v628 = vpow.pop %v627
    %v629 = vadd.f32 %v628, 1.0
    %v630 = vrcp.pop %v629
    %v631 = vmul.f32 %v629, %v630
    %v632 = vsub.f32 1.0, %v631
    %v633 = vmul.f32 %v630, %v632
    %v634 = vadd.f32 %v630, %v633
    %vm635 = vweird.f32 %v629
    %vm636 = vweird.f32 %v630
    %vm637 = vmor %vm635, %vm636
    %v638 = vsel %vm637, %v630, %v634
    %v639 = vand.u32 2147483647, %v629
    %vm640 = vcmp.eq.f32.partialorder %v639, 8.507059e+37
    %v641 = vand.u32 %v629, 2147483648
    %v642 = vor.u32 1.1754944e-38, %v641
    %v643 = vsel %vm640, %v642, %v638
    %v644 = vmul.f32 1.0, %v643
    %v645 = vtanh.pop %v625
    %v646 = vxor.u32 %v625, 2147483648
    %v647 = vmul.f32 %v646, 1.442695
    %v648 = vpow.pop %v647
    %v649 = vadd.f32 %v648, 1.0
    %v650 = vrcp.pop %v649
    %v651 = vmul.f32 %v649, %v650
    %v652 = vsub.f32 1.0, %v651
    %v653 = vmul.f32 %v650, %v652
    %v654 = vadd.f32 %v650, %v653
    %vm655 = vweird.f32 %v649
    %vm656 = vweird.f32 %v650
    %vm657 = vmor %vm655, %vm656
    %v658 = vsel %vm657, %v650, %v654
    %v659 = vand.u32 2147483647, %v649
    %vm660 = vcmp.eq.f32.partialorder %v659, 8.507059e+37
    %v661 = vand.u32 %v649, 2147483648
    %v662 = vor.u32 1.1754944e-38, %v661
    %v663 = vsel %vm660, %v662, %v658
    %v664 = vmul.f32 1.0, %v663
    %v665 = vmul.f32 %v644, %v587
    %v666 = vmul.f32 %v644, %v645
    %668 = vrot.lane.b32.xlu0 %v666, 64
    %v669 = vpop.permute.xlu0 %668
    %v671 = vadd.f32 %v665, %v669
    %v672 = vtanh.pop %v671
    %v673 = vmul.f32 %v664, %v672
    %v674 = vadd.f32 %v590, %v673
    %v675 = vpack.c.bf16 %v673, %v673
    %677 = vrot.lane.b32.xlu0 %v675, 64
    %v678 = vpop.permute.xlu0 %677
    %v680 = vsel %vm328, %v678, 0
    %682 = vmatpush.bf16.msra.mxu0 0
    %683 = vmatpush.bf16.msra.mxu0 0
    %684 = vmatpush.bf16.msra.mxu0 0
    %685 = vmatpush.bf16.msra.mxu0 0
    %686 = vmatpush.bf16.msra.mxu0 %v318
    %687 = vmatpush.bf16.msra.mxu0 %v316
    %688 = vmatpush.bf16.msra.mxu0 %v314
    %689 = vmatpush.bf16.msra.mxu0 %v312
    %690 = vmatmul.bf16.gmra.mxu0 %v680
    %v691 = vpop.f32.mrf.mxu0
    %v692 = vadd.f32 0.0, %v691
    %v693 = vpop.f32.mrf.mxu0
    %694 = vdwg.mxu0
    %695 = vmatpush.bf16.msra.mxu0 0
    %696 = vmatpush.bf16.msra.mxu0 0
    %697 = vmatpush.bf16.msra.mxu0 0
    %698 = vmatpush.bf16.msra.mxu0 0
    %699 = vmatpush.bf16.msra.mxu0 %v319
    %700 = vmatpush.bf16.msra.mxu0 %v317
    %701 = vmatpush.bf16.msra.mxu0 %v315
    %702 = vmatpush.bf16.msra.mxu0 %v313
    %703 = vmatmul.bf16.gmra.mxu0 %v680
    %v704 = vpop.f32.mrf.mxu0
    %v705 = vadd.f32 0.0, %v704
    %v706 = vpop.f32.mrf.mxu0
    %707 = vdwg.mxu0
    %v708 = vadd.f32 %v223, %v692
    %v709 = vadd.f32 %v252, %v705
    %v710 = vxor.u32 %v708, 2147483648
    %v711 = vmul.f32 %v710, 1.442695
    %v712 = vpow.pop %v711
    %v713 = vadd.f32 %v712, 1.0
    %v714 = vrcp.pop %v713
    %v715 = vmul.f32 %v713, %v714
    %v716 = vsub.f32 1.0, %v715
    %v717 = vmul.f32 %v714, %v716
    %v718 = vadd.f32 %v714, %v717
    %vm719 = vweird.f32 %v713
    %vm720 = vweird.f32 %v714
    %vm721 = vmor %vm719, %vm720
    %v722 = vsel %vm721, %v714, %v718
    %v723 = vand.u32 2147483647, %v713
    %vm724 = vcmp.eq.f32.partialorder %v723, 8.507059e+37
    %v725 = vand.u32 %v713, 2147483648
    %v726 = vor.u32 1.1754944e-38, %v725
    %v727 = vsel %vm724, %v726, %v722
    %v728 = vmul.f32 1.0, %v727
    %v729 = vtanh.pop %v709
    %v730 = vxor.u32 %v709, 2147483648
    %v731 = vmul.f32 %v730, 1.442695
    %v732 = vpow.pop %v731
    %v733 = vadd.f32 %v732, 1.0
    %v734 = vrcp.pop %v733
    %v735 = vmul.f32 %v733, %v734
    %v736 = vsub.f32 1.0, %v735
    %v737 = vmul.f32 %v734, %v736
    %v738 = vadd.f32 %v734, %v737
    %vm739 = vweird.f32 %v733
    %vm740 = vweird.f32 %v734
    %vm741 = vmor %vm739, %vm740
    %v742 = vsel %vm741, %v734, %v738
    %v743 = vand.u32 2147483647, %v733
    %vm744 = vcmp.eq.f32.partialorder %v743, 8.507059e+37
    %v745 = vand.u32 %v733, 2147483648
    %v746 = vor.u32 1.1754944e-38, %v745
    %v747 = vsel %vm744, %v746, %v742
    %v748 = vmul.f32 1.0, %v747
    %v749 = vmul.f32 %v728, %v671
    %v750 = vmul.f32 %v728, %v729
    %752 = vrot.lane.b32.xlu0 %v750, 64
    %v753 = vpop.permute.xlu0 %752
    %v755 = vadd.f32 %v749, %v753
    %v756 = vtanh.pop %v755
    %v757 = vmul.f32 %v748, %v756
    %v758 = vadd.f32 %v674, %v757
    %v759 = vpack.c.bf16 %v757, %v757
    %761 = vrot.lane.b32.xlu0 %v759, 64
    %v762 = vpop.permute.xlu0 %761
    %v764 = vsel %vm328, %v762, 0
    %766 = vmatpush.bf16.msra.mxu0 0
    %767 = vmatpush.bf16.msra.mxu0 0
    %768 = vmatpush.bf16.msra.mxu0 0
    %769 = vmatpush.bf16.msra.mxu0 0
    %770 = vmatpush.bf16.msra.mxu0 %v318
    %771 = vmatpush.bf16.msra.mxu0 %v316
    %772 = vmatpush.bf16.msra.mxu0 %v314
    %773 = vmatpush.bf16.msra.mxu0 %v312
    %774 = vmatmul.bf16.gmra.mxu0 %v764
    %v775 = vpop.f32.mrf.mxu0
    %v776 = vadd.f32 0.0, %v775
    %v777 = vpop.f32.mrf.mxu0
    %778 = vdwg.mxu0
    %779 = vmatpush.bf16.msra.mxu0 0
    %780 = vmatpush.bf16.msra.mxu0 0
    %781 = vmatpush.bf16.msra.mxu0 0
    %782 = vmatpush.bf16.msra.mxu0 0
    %783 = vmatpush.bf16.msra.mxu0 %v319
    %784 = vmatpush.bf16.msra.mxu0 %v317
    %785 = vmatpush.bf16.msra.mxu0 %v315
    %786 = vmatpush.bf16.msra.mxu0 %v313
    %787 = vmatmul.bf16.gmra.mxu0 %v764
    %v788 = vpop.f32.mrf.mxu0
    %v789 = vadd.f32 0.0, %v788
    %v790 = vpop.f32.mrf.mxu0
    %791 = vdwg.mxu0
    %v792 = vadd.f32 %v225, %v776
    %v793 = vadd.f32 %v254, %v789
    %v794 = vxor.u32 %v792, 2147483648
    %v795 = vmul.f32 %v794, 1.442695
    %v796 = vpow.pop %v795
    %v797 = vadd.f32 %v796, 1.0
    %v798 = vrcp.pop %v797
    %v799 = vmul.f32 %v797, %v798
    %v800 = vsub.f32 1.0, %v799
    %v801 = vmul.f32 %v798, %v800
    %v802 = vadd.f32 %v798, %v801
    %vm803 = vweird.f32 %v797
    %vm804 = vweird.f32 %v798
    %vm805 = vmor %vm803, %vm804
    %v806 = vsel %vm805, %v798, %v802
    %v807 = vand.u32 2147483647, %v797
    %vm808 = vcmp.eq.f32.partialorder %v807, 8.507059e+37
    %v809 = vand.u32 %v797, 2147483648
    %v810 = vor.u32 1.1754944e-38, %v809
    %v811 = vsel %vm808, %v810, %v806
    %v812 = vmul.f32 1.0, %v811
    %v813 = vtanh.pop %v793
    %v814 = vxor.u32 %v793, 2147483648
    %v815 = vmul.f32 %v814, 1.442695
    %v816 = vpow.pop %v815
    %v817 = vadd.f32 %v816, 1.0
    %v818 = vrcp.pop %v817
    %v819 = vmul.f32 %v817, %v818
    %v820 = vsub.f32 1.0, %v819
    %v821 = vmul.f32 %v818, %v820
    %v822 = vadd.f32 %v818, %v821
    %vm823 = vweird.f32 %v817
    %vm824 = vweird.f32 %v818
    %vm825 = vmor %vm823, %vm824
    %v826 = vsel %vm825, %v818, %v822
    %v827 = vand.u32 2147483647, %v817
    %vm828 = vcmp.eq.f32.partialorder %v827, 8.507059e+37
    %v829 = vand.u32 %v817, 2147483648
    %v830 = vor.u32 1.1754944e-38, %v829
    %v831 = vsel %vm828, %v830, %v826
    %v832 = vmul.f32 1.0, %v831
    %v833 = vmul.f32 %v812, %v755
    %v834 = vmul.f32 %v812, %v813
    %836 = vrot.lane.b32.xlu0 %v834, 64
    %v837 = vpop.permute.xlu0 %836
    %v839 = vadd.f32 %v833, %v837
    %v840 = vtanh.pop %v839
    %v841 = vmul.f32 %v832, %v840
    %v842 = vadd.f32 %v758, %v841
    %v843 = vpack.c.bf16 %v841, %v841
    %845 = vrot.lane.b32.xlu0 %v843, 64
    %v846 = vpop.permute.xlu0 %845
    %v848 = vsel %vm328, %v846, 0
    %850 = vmatpush.bf16.msra.mxu0 0
    %851 = vmatpush.bf16.msra.mxu0 0
    %852 = vmatpush.bf16.msra.mxu0 0
    %853 = vmatpush.bf16.msra.mxu0 0
    %854 = vmatpush.bf16.msra.mxu0 %v318
    %855 = vmatpush.bf16.msra.mxu0 %v316
    %856 = vmatpush.bf16.msra.mxu0 %v314
    %857 = vmatpush.bf16.msra.mxu0 %v312
    %858 = vmatmul.bf16.gmra.mxu0 %v848
    %v859 = vpop.f32.mrf.mxu0
    %v860 = vadd.f32 0.0, %v859
    %v861 = vpop.f32.mrf.mxu0
    %862 = vdwg.mxu0
    %863 = vmatpush.bf16.msra.mxu0 0
    %864 = vmatpush.bf16.msra.mxu0 0
    %865 = vmatpush.bf16.msra.mxu0 0
    %866 = vmatpush.bf16.msra.mxu0 0
    %867 = vmatpush.bf16.msra.mxu0 %v319
    %868 = vmatpush.bf16.msra.mxu0 %v317
    %869 = vmatpush.bf16.msra.mxu0 %v315
    %870 = vmatpush.bf16.msra.mxu0 %v313
    %871 = vmatmul.bf16.gmra.mxu0 %v848
    %v872 = vpop.f32.mrf.mxu0
    %v873 = vadd.f32 0.0, %v872
    %v874 = vpop.f32.mrf.mxu0
    %875 = vdwg.mxu0
    %v876 = vadd.f32 %v228, %v860
    %v877 = vadd.f32 %v257, %v873
    %v878 = vxor.u32 %v876, 2147483648
    %v879 = vmul.f32 %v878, 1.442695
    %v880 = vpow.pop %v879
    %v881 = vadd.f32 %v880, 1.0
    %v882 = vrcp.pop %v881
    %v883 = vmul.f32 %v881, %v882
    %v884 = vsub.f32 1.0, %v883
    %v885 = vmul.f32 %v882, %v884
    %v886 = vadd.f32 %v882, %v885
    %vm887 = vweird.f32 %v881
    %vm888 = vweird.f32 %v882
    %vm889 = vmor %vm887, %vm888
    %v890 = vsel %vm889, %v882, %v886
    %v891 = vand.u32 2147483647, %v881
    %vm892 = vcmp.eq.f32.partialorder %v891, 8.507059e+37
    %v893 = vand.u32 %v881, 2147483648
    %v894 = vor.u32 1.1754944e-38, %v893
    %v895 = vsel %vm892, %v894, %v890
    %v896 = vmul.f32 1.0, %v895
    %v897 = vtanh.pop %v877
    %v898 = vxor.u32 %v877, 2147483648
    %v899 = vmul.f32 %v898, 1.442695
    %v900 = vpow.pop %v899
    %v901 = vadd.f32 %v900, 1.0
    %v902 = vrcp.pop %v901
    %v903 = vmul.f32 %v901, %v902
    %v904 = vsub.f32 1.0, %v903
    %v905 = vmul.f32 %v902, %v904
    %v906 = vadd.f32 %v902, %v905
    %vm907 = vweird.f32 %v901
    %vm908 = vweird.f32 %v902
    %vm909 = vmor %vm907, %vm908
    %v910 = vsel %vm909, %v902, %v906
    %v911 = vand.u32 2147483647, %v901
    %vm912 = vcmp.eq.f32.partialorder %v911, 8.507059e+37
    %v913 = vand.u32 %v901, 2147483648
    %v914 = vor.u32 1.1754944e-38, %v913
    %v915 = vsel %vm912, %v914, %v910
    %v916 = vmul.f32 1.0, %v915
    %v917 = vmul.f32 %v896, %v839
    %v918 = vmul.f32 %v896, %v897
    %920 = vrot.lane.b32.xlu0 %v918, 64
    %v921 = vpop.permute.xlu0 %920
    %v923 = vadd.f32 %v917, %v921
    %v924 = vtanh.pop %v923
    %v925 = vmul.f32 %v916, %v924
    %v926 = vadd.f32 %v842, %v925
    %v927 = vpack.c.bf16 %v925, %v925
    %929 = vrot.lane.b32.xlu0 %v927, 64
    %v930 = vpop.permute.xlu0 %929
    %v932 = vsel %vm328, %v930, 0
    %934 = vmatpush.bf16.msra.mxu0 0
    %935 = vmatpush.bf16.msra.mxu0 0
    %936 = vmatpush.bf16.msra.mxu0 0
    %937 = vmatpush.bf16.msra.mxu0 0
    %938 = vmatpush.bf16.msra.mxu0 %v318
    %939 = vmatpush.bf16.msra.mxu0 %v316
    %940 = vmatpush.bf16.msra.mxu0 %v314
    %941 = vmatpush.bf16.msra.mxu0 %v312
    %942 = vmatmul.bf16.gmra.mxu0 %v932
    %v943 = vpop.f32.mrf.mxu0
    %v944 = vadd.f32 0.0, %v943
    %v945 = vpop.f32.mrf.mxu0
    %946 = vdwg.mxu0
    %947 = vmatpush.bf16.msra.mxu0 0
    %948 = vmatpush.bf16.msra.mxu0 0
    %949 = vmatpush.bf16.msra.mxu0 0
    %950 = vmatpush.bf16.msra.mxu0 0
    %951 = vmatpush.bf16.msra.mxu0 %v319
    %952 = vmatpush.bf16.msra.mxu0 %v317
    %953 = vmatpush.bf16.msra.mxu0 %v315
    %954 = vmatpush.bf16.msra.mxu0 %v313
    %955 = vmatmul.bf16.gmra.mxu0 %v932
    %v956 = vpop.f32.mrf.mxu0
    %v957 = vadd.f32 0.0, %v956
    %v958 = vpop.f32.mrf.mxu0
    %959 = vdwg.mxu0
    %v960 = vadd.f32 %v230, %v944
    %v961 = vadd.f32 %v259, %v957
    %v962 = vxor.u32 %v960, 2147483648
    %v963 = vmul.f32 %v962, 1.442695
    %v964 = vpow.pop %v963
    %v965 = vadd.f32 %v964, 1.0
    %v966 = vrcp.pop %v965
    %v967 = vmul.f32 %v965, %v966
    %v968 = vsub.f32 1.0, %v967
    %v969 = vmul.f32 %v966, %v968
    %v970 = vadd.f32 %v966, %v969
    %vm971 = vweird.f32 %v965
    %vm972 = vweird.f32 %v966
    %vm973 = vmor %vm971, %vm972
    %v974 = vsel %vm973, %v966, %v970
    %v975 = vand.u32 2147483647, %v965
    %vm976 = vcmp.eq.f32.partialorder %v975, 8.507059e+37
    %v977 = vand.u32 %v965, 2147483648
    %v978 = vor.u32 1.1754944e-38, %v977
    %v979 = vsel %vm976, %v978, %v974
    %v980 = vmul.f32 1.0, %v979
    %v981 = vtanh.pop %v961
    %v982 = vxor.u32 %v961, 2147483648
    %v983 = vmul.f32 %v982, 1.442695
    %v984 = vpow.pop %v983
    %v985 = vadd.f32 %v984, 1.0
    %v986 = vrcp.pop %v985
    %v987 = vmul.f32 %v985, %v986
    %v988 = vsub.f32 1.0, %v987
    %v989 = vmul.f32 %v986, %v988
    %v990 = vadd.f32 %v986, %v989
    %vm991 = vweird.f32 %v985
    %vm992 = vweird.f32 %v986
    %vm993 = vmor %vm991, %vm992
    %v994 = vsel %vm993, %v986, %v990
    %v995 = vand.u32 2147483647, %v985
    %vm996 = vcmp.eq.f32.partialorder %v995, 8.507059e+37
    %v997 = vand.u32 %v985, 2147483648
    %v998 = vor.u32 1.1754944e-38, %v997
    %v999 = vsel %vm996, %v998, %v994
    %v1000 = vmul.f32 1.0, %v999
    %v1001 = vmul.f32 %v980, %v923
    %v1002 = vmul.f32 %v980, %v981
    %1004 = vrot.lane.b32.xlu0 %v1002, 64
    %v1005 = vpop.permute.xlu0 %1004
    %v1007 = vadd.f32 %v1001, %v1005
    %v1008 = vtanh.pop %v1007
    %v1009 = vmul.f32 %v1000, %v1008
    %v1010 = vadd.f32 %v926, %v1009
    %v1011 = vpack.c.bf16 %v1009, %v1009
    %1013 = vrot.lane.b32.xlu0 %v1011, 64
    %v1014 = vpop.permute.xlu0 %1013
    %v1016 = vsel %vm328, %v1014, 0
    %1018 = vmatpush.bf16.msra.mxu0 0
    %1019 = vmatpush.bf16.msra.mxu0 0
    %1020 = vmatpush.bf16.msra.mxu0 0
    %1021 = vmatpush.bf16.msra.mxu0 0
    %1022 = vmatpush.bf16.msra.mxu0 %v318
    %1023 = vmatpush.bf16.msra.mxu0 %v316
    %1024 = vmatpush.bf16.msra.mxu0 %v314
    %1025 = vmatpush.bf16.msra.mxu0 %v312
    %1026 = vmatmul.bf16.gmra.mxu0 %v1016
    %v1027 = vpop.f32.mrf.mxu0
    %v1028 = vadd.f32 0.0, %v1027
    %v1029 = vpop.f32.mrf.mxu0
    %1030 = vdwg.mxu0
    %1031 = vmatpush.bf16.msra.mxu0 0
    %1032 = vmatpush.bf16.msra.mxu0 0
    %1033 = vmatpush.bf16.msra.mxu0 0
    %1034 = vmatpush.bf16.msra.mxu0 0
    %1035 = vmatpush.bf16.msra.mxu0 %v319
    %1036 = vmatpush.bf16.msra.mxu0 %v317
    %1037 = vmatpush.bf16.msra.mxu0 %v315
    %1038 = vmatpush.bf16.msra.mxu0 %v313
    %1039 = vmatmul.bf16.gmra.mxu0 %v1016
    %v1040 = vpop.f32.mrf.mxu0
    %v1041 = vadd.f32 0.0, %v1040
    %v1042 = vpop.f32.mrf.mxu0
    %1043 = vdwg.mxu0
    %v1044 = vxor.u32 %v1028, 2147483648
    %v1045 = vmul.f32 %v1044, 1.442695
    %v1046 = vpow.pop %v1045
    %v1047 = vadd.f32 %v1046, 1.0
    %v1048 = vrcp.pop %v1047
    %v1049 = vmul.f32 %v1047, %v1048
    %v1050 = vsub.f32 1.0, %v1049
    %v1051 = vmul.f32 %v1048, %v1050
    %v1052 = vadd.f32 %v1048, %v1051
    %vm1053 = vweird.f32 %v1047
    %vm1054 = vweird.f32 %v1048
    %vm1055 = vmor %vm1053, %vm1054
    %v1056 = vsel %vm1055, %v1048, %v1052
    %v1057 = vand.u32 2147483647, %v1047
    %vm1058 = vcmp.eq.f32.partialorder %v1057, 8.507059e+37
    %v1059 = vand.u32 %v1047, 2147483648
    %v1060 = vor.u32 1.1754944e-38, %v1059
    %v1061 = vsel %vm1058, %v1060, %v1056
    %v1062 = vmul.f32 1.0, %v1061
    %v1063 = vtanh.pop %v1041
    %v1064 = vxor.u32 %v1041, 2147483648
    %v1065 = vmul.f32 %v1064, 1.442695
    %v1066 = vpow.pop %v1065
    %v1067 = vadd.f32 %v1066, 1.0
    %v1068 = vrcp.pop %v1067
    %v1069 = vmul.f32 %v1067, %v1068
    %v1070 = vsub.f32 1.0, %v1069
    %v1071 = vmul.f32 %v1068, %v1070
    %v1072 = vadd.f32 %v1068, %v1071
    %vm1073 = vweird.f32 %v1067
    %vm1074 = vweird.f32 %v1068
    %vm1075 = vmor %vm1073, %vm1074
    %v1076 = vsel %vm1075, %v1068, %v1072
    %v1077 = vand.u32 2147483647, %v1067
    %vm1078 = vcmp.eq.f32.partialorder %v1077, 8.507059e+37
    %v1079 = vand.u32 %v1067, 2147483648
    %v1080 = vor.u32 1.1754944e-38, %v1079
    %v1081 = vsel %vm1078, %v1080, %v1076
    %v1082 = vmul.f32 1.0, %v1081
    %v1083 = vmul.f32 %v1062, %v1007
    %v1084 = vmul.f32 %v1062, %v1063
    %1086 = vrot.lane.b32.xlu0 %v1084, 64
    %v1087 = vpop.permute.xlu0 %1086
    %v1089 = vadd.f32 %v1083, %v1087
    %v1090 = vtanh.pop %v1089
    %v1091 = vmul.f32 %v1082, %v1090
    %v1092 = vadd.f32 %v1010, %v1091
    %1094 = vrot.lane.b32.xlu0 %v1009, 64
    %v1095 = vpop.permute.xlu0 %1094
    %1098 = vrot.lane.b32.xlu0 %v1091, 64
    %v1099 = vpop.permute.xlu0 %1098
    %v1101 = vsel %vm269, %v1095, %v1099
    %1103 = vrot.lane.b32.xlu0 %v1007, 64
    %v1104 = vpop.permute.xlu0 %1103
    %1107 = vrot.lane.b32.xlu0 %v1089, 64
    %v1108 = vpop.permute.xlu0 %1107
    %v1110 = vsel %vm269, %v1104, %v1108
    %v1111 = vmul.f32 %v1092, 0.125
    %v1112 = vpack.c.bf16 %v1111, %v1111
    %v1113 = vld [vmem:[%s3] sm:$0xf]
    %v1114 = vld [vmem:[%s3 + $0x4] sm:$0xf]
    %v1115 = vld [vmem:[%s3 + $0x8] sm:$0xf]
    %v1116 = vld [vmem:[%s3 + $0xc] sm:$0xf]
    %v1117 = vld [vmem:[%s4] sm:$0x1]
    %v1119 = vperm.slane %v1117, 0
    %1122 = vrot.lane.b32.xlu0 %v1112, 32
    %v1123 = vpop.permute.xlu0 %1122
    %v1128 = vunpack.c.l.b16 %v1113
    %v1129 = vunpack.c.l.b16 %v1114
    %v1130 = vunpack.c.l.b16 %v1115
    %v1131 = vunpack.c.l.b16 %v1116
    %v1132 = vpack.c.b16 %v1129, %v1128
    %v1133 = vpack.c.b16 %v1131, %v1130
    %v1137 = vsel %vm277, %v1123, 0
    %1139 = vmatpush.bf16.msra.mxu0 0
    %1140 = vmatpush.bf16.msra.mxu0 0
    %1141 = vmatpush.bf16.msra.mxu0 0
    %1142 = vmatpush.bf16.msra.mxu0 0
    %1143 = vmatpush.bf16.msra.mxu0 0
    %1144 = vmatpush.bf16.msra.mxu0 0
    %1145 = vmatpush.bf16.msra.mxu0 %v1133
    %1146 = vmatpush.bf16.msra.mxu0 %v1132
    %1147 = vmatmul.bf16.gmra.mxu0 %v1137
    %v1148 = vpop.f32.mrf.mxu0
    %v1149 = vadd.f32 %v1119, %v1148
    %v1150 = vpop.f32.mrf.mxu0
    %1151 = vdwg.mxu0
    %1152 = vst [vmem:[%s7] sm:$0xff] %v1149
    %1154 = vrot.lane.b32.xlu0 %v1110, 64
    %v1155 = vpop.permute.xlu0 %1154
    %v1157 = vsel %vm328, %v1101, %v1155
    %1158 = vst [vmem:[%s8] sm:$0xff] %v1157
    // Predicated region
    $region34: #{basic_rnn_forward.1} parent=1 // pred_check
      _
    $region35: #{basic_rnn_forward.1} parent=1 // pred_check_branch
      %1160 = sbr.rel (0) target = $region37
    $region36: #{basic_rnn_forward.1} parent=1 // pred_region
      _
    $region37: #{basic_rnn_forward.1} parent=1 // pred_fallthru
      _
    // Predicated region
    $region38: #{basic_rnn_forward.1} parent=1 // pred_check
      _
    $region39: #{basic_rnn_forward.1} parent=1 // pred_check_branch
      %1162 = sbr.rel (0) target = $region41
    $region40: #{basic_rnn_forward.1} parent=1 // pred_region
      _
    $region41: #{basic_rnn_forward.1} parent=1 // pred_fallthru
      _
    // Predicated region
    $region42: #{basic_rnn_forward.1} parent=1 // pred_check
      _
    $region43: #{basic_rnn_forward.1} parent=1 // pred_check_branch
      %1164 = sbr.rel (0) target = $region45
    $region44: #{basic_rnn_forward.1} parent=1 // pred_region
      _
    $region45: #{basic_rnn_forward.1} parent=1 // pred_fallthru
      _
    // Predicated region
    $region46: #{basic_rnn_forward.1} parent=1 // pred_check
      _
    $region47: #{basic_rnn_forward.1} parent=1 // pred_check_branch
      %1166 = sbr.rel (0) target = $region49
    $region48: #{basic_rnn_forward.1} parent=1 // pred_region
      _
    $region49: #{basic_rnn_forward.1} parent=1 // pred_fallthru
      _
    %1167 = vsyncpa [#allocation3], 1

</llo_original>
